<compile_context>
chip_gen: v7x
topology: tpu7x:2x2x1
jax: 0.10.0
libtpu: 0.0.40
codegen_flags: <defaults>
</compile_context>

<pallas_src>
import jax
import jax.numpy as jnp
from jax.experimental import pallas as pl
from jax.experimental.pallas import tpu as pltpu


def lstm_chunk_kernel(xp_ref, whh_ref, out_ref, h_ref, c_ref):
    """One grid step = one chunk of Tc timesteps.

    xp_ref : (Tc, B, 4H) f32   precomputed x @ W_ih + b for this chunk
    whh_ref: (H, 4H)     bf16  fused recurrent weights (gate order i,f,g,o)
    out_ref: (B, Tc, H)  f32   per-step hidden outputs, batch-first
    h_ref  : (1, B, H)   f32   resident block: carried / final hidden state
    c_ref  : (1, B, H)   f32   resident block: carried / final cell state
    """
    chunk = pl.program_id(0)
    tc = xp_ref.shape[0]
    H = whh_ref.shape[0]

    @pl.when(chunk == 0)
    def _():
        h_ref[...] = jnp.zeros_like(h_ref)
        c_ref[...] = jnp.zeros_like(c_ref)

    w_hh = whh_ref[...]          # (H, 4H) bf16, resident across all chunks
    h = h_ref[0]                 # (B, H) f32 carry
    c = c_ref[0]                 # (B, H) f32 carry

    # Static unroll over the chunk: gives the LLO scheduler a window to overlap
    # the EUP (sigmoid/tanh) of step s with the MXU push of step s+1.
    for s in range(tc):
        gates = xp_ref[s] + jnp.dot(h.astype(w_hh.dtype), w_hh,
                                    preferred_element_type=jnp.float32)  # (B, 4H)
        i_g = jax.nn.sigmoid(gates[:, 0 * H:1 * H])
        f_g = jax.nn.sigmoid(gates[:, 1 * H:2 * H])
        g_g = jnp.tanh(gates[:, 2 * H:3 * H])
        o_g = jax.nn.sigmoid(gates[:, 3 * H:4 * H])
        c = f_g * c + i_g * g_g
        h = o_g * jnp.tanh(c)
        out_ref[:, s:s + 1, :] = h[:, None, :]   # static slice, lane-dense in H

    # Write the carry once per chunk (not per timestep); after the last chunk
    # these resident blocks hold exactly the final (hidden, cell) states.
    h_ref[0] = h
    c_ref[0] = c


def _pick_time_chunk(T, max_chunk=8):
    """Largest chunk <= max_chunk that divides T, preferring sublane-aligned (x8)."""
    if T <= max_chunk:
        return T
    best = 1
    for tc in range(1, min(max_chunk, T) + 1):
        if T % tc == 0:
            if tc % 8 == 0:
                best = tc
            elif best % 8 != 0 and tc > best:
                best = tc
    return best


def lstm_pallas(x_proj_tb4h, w_hh_fused, *, time_chunk=None,
                recurrent_dtype=jnp.bfloat16):
    """x_proj_tb4h: (T, B, 4H) f32 (x@W_ih + bias, time-major).
       w_hh_fused : (H, 4H) with gate columns ordered [i|f|g|o]."""
    T, B, H4 = x_proj_tb4h.shape
    H = H4 // 4
    tc = time_chunk if time_chunk is not None else _pick_time_chunk(T)
    assert T % tc == 0, f"time_chunk {tc} must divide T={T}"
    n_chunks = T // tc

    out, h_n, c_n = pl.pallas_call(
        lstm_chunk_kernel,
        out_shape=(
            jax.ShapeDtypeStruct((B, T, H), jnp.float32),   # batch_first output
            jax.ShapeDtypeStruct((1, B, H), jnp.float32),   # final hidden
            jax.ShapeDtypeStruct((1, B, H), jnp.float32),   # final cell
        ),
        grid_spec=pltpu.PrefetchScalarGridSpec(
            num_scalar_prefetch=0,
            grid=(n_chunks,),
            in_specs=[
                pl.BlockSpec((tc, B, H4), lambda c: (c, 0, 0)),   # x-proj chunk
                pl.BlockSpec((H, H4), lambda c: (0, 0)),          # W_hh (resident)
            ],
            out_specs=[
                pl.BlockSpec((B, tc, H), lambda c: (0, c, 0)),    # output chunk (B,Tc,H)
                pl.BlockSpec((1, B, H), lambda c: (0, 0, 0)),     # hidden carry/final
                pl.BlockSpec((1, B, H), lambda c: (0, 0, 0)),     # cell carry/final
            ],
        ),
        compiler_params=pltpu.CompilerParams(
            dimension_semantics=("arbitrary",)),   # recurrence -> sequential
    )(x_proj_tb4h, w_hh_fused.astype(recurrent_dtype))
    return out, h_n, c_n


def encoder_forward(token_ids, params, *, time_chunk=None):
    """token_ids: (B, T) int32.  Returns (output (B,T,H), hidden (1,B,H), cell (1,B,H))."""
    emb = params["embed"]                               # (V, E)
    # Gather directly time-major: transpose the small (B,T) int ids, not floats.
    x_tbe = jnp.take(emb, token_ids.T, axis=0)          # (T, B, E)
    T, B, E = x_tbe.shape
    H = params["w_hh"].shape[0]
    # Hoisted input projection: one big (T*B, E) x (E, 4H) matmul + bias in XLA
    # (f32; keeps the precision-sensitive part out of the bf16 recurrent GEMM).
    x_proj = (x_tbe.reshape(T * B, E) @ params["w_ih"]
              + params["bias"]).reshape(T, B, 4 * H)    # (T, B, 4H)
    out, h_n, c_n = lstm_pallas(x_proj, params["w_hh"], time_chunk=time_chunk)
    return out, h_n, c_n


def reference_forward(token_ids, params):
    """Pure-JAX f32 reference (lax.scan) matching nn.LSTM semantics."""
    emb = params["embed"]
    x_tbe = jnp.take(emb, token_ids.T, axis=0)          # (T, B, E)
    w_ih, w_hh, bias = params["w_ih"], params["w_hh"], params["bias"]
    B = token_ids.shape[0]
    H = w_hh.shape[0]

    def step(carry, x_t):
        h, c = carry
        g = x_t @ w_ih + h @ w_hh + bias                # (B, 4H)
        i_g = jax.nn.sigmoid(g[:, 0 * H:1 * H])
        f_g = jax.nn.sigmoid(g[:, 1 * H:2 * H])
        g_g = jnp.tanh(g[:, 2 * H:3 * H])
        o_g = jax.nn.sigmoid(g[:, 3 * H:4 * H])
        c_new = f_g * c + i_g * g_g
        h_new = o_g * jnp.tanh(c_new)
        return (h_new, c_new), h_new

    init = (jnp.zeros((B, H), jnp.float32), jnp.zeros((B, H), jnp.float32))
    (h_n, c_n), out_tbh = jax.lax.scan(step, init, x_tbe)
    return jnp.transpose(out_tbh, (1, 0, 2)), h_n[None], c_n[None]


def make_params(key, vocab_size, embed_size, hidden_size):
    k_emb, k_wih, k_whh, k_bih, k_bhh = jax.random.split(key, 5)
    # nn.Embedding: N(0,1); nn.LSTM: U(-1/sqrt(H), 1/sqrt(H)); gate order i,f,g,o.
    scale = 1.0 / jnp.sqrt(jnp.float32(hidden_size))
    embed = jax.random.normal(k_emb, (vocab_size, embed_size), jnp.float32)
    w_ih_pt = jax.random.uniform(k_wih, (4 * hidden_size, embed_size), jnp.float32,
                                 -scale, scale)                        # (4H, E)
    w_hh_pt = jax.random.uniform(k_whh, (4 * hidden_size, hidden_size), jnp.float32,
                                 -scale, scale)                        # (4H, H)
    b_ih = jax.random.uniform(k_bih, (4 * hidden_size,), jnp.float32, -scale, scale)
    b_hh = jax.random.uniform(k_bhh, (4 * hidden_size,), jnp.float32, -scale, scale)
    # Fused right-multiply layout: columns ordered [i | f | g | o].
    w_ih = w_ih_pt.T                    # (E, 4H)
    w_hh = w_hh_pt.T                    # (H, 4H)
    bias = b_ih + b_hh                  # (4H,)
    return {"embed": embed, "w_ih": w_ih, "w_hh": w_hh, "bias": bias}


if __name__ == "__main__":
    # Small shapes consistent with the module (scaled down from E=64/H=512).
    # Real shapes (E=64, H=512) map cleanly onto (8,128) tiles; the toy config is
    # intentionally tiny and therefore lane-padded.
    vocab_size, embed_size, hidden_size = 50, 32, 32
    batch, seq, time_chunk = 2, 16, 8    # grid = (2,) -> exercises chunked carry

    key = jax.random.PRNGKey(0)
    k_param, k_tok = jax.random.split(key)
    params = make_params(k_param, vocab_size, embed_size, hidden_size)
    token_ids = jax.random.randint(k_tok, (batch, seq), 0, vocab_size, jnp.int32)

    @jax.jit
    def run(tok, p):
        return encoder_forward(tok, p, time_chunk=time_chunk)

    output, hidden, cell = jax.block_until_ready(run(token_ids, params))
    ref_out, ref_h, ref_c = reference_forward(token_ids, params)

    assert output.shape == (batch, seq, hidden_size)
    assert hidden.shape == (1, batch, hidden_size)
    assert cell.shape == (1, batch, hidden_size)
    # Recurrent GEMM runs in bf16 (f32 accumulation) -> relaxed tolerances.
    assert jnp.allclose(output, ref_out, atol=2e-2, rtol=2e-2)
    assert jnp.allclose(hidden, ref_h, atol=2e-2, rtol=2e-2)
    assert jnp.allclose(cell, ref_c, atol=2e-2, rtol=2e-2)

    print("KERNEL_OK")
</pallas_src>

<mosaic_0001>
module attributes {stable_mosaic.version = 11 : i64} {
  func.func @lstm_chunk_kernel(%arg0: i32, %arg1: memref<8x2x128xf32, #tpu.memory_space<vmem>>, %arg2: memref<32x128xbf16, #tpu.memory_space<vmem>>, %arg3: memref<2x8x32xf32, #tpu.memory_space<vmem>>, %arg4: memref<1x2x32xf32, #tpu.memory_space<vmem>>, %arg5: memref<1x2x32xf32, #tpu.memory_space<vmem>>) attributes {dimension_semantics = [#tpu.dimension_semantics<arbitrary>], iteration_bounds = array<i64: 2>, scalar_prefetch = 0 : i64, scratch_operands = 0 : i64, tpu.core_type = #tpu.core_type<tc>, window_params = [{transform_indices = @transform_0, window_bounds = array<i64: 8, 2, 128>}, {pipeline_mode = #tpu.pipeline_mode<synchronous>, transform_indices = @transform_1, window_bounds = array<i64: 32, 128>}, {transform_indices = @transform_2, window_bounds = array<i64: 2, 8, 32>}, {pipeline_mode = #tpu.pipeline_mode<synchronous>, transform_indices = @transform_3, window_bounds = array<i64: 1, 2, 32>}, {pipeline_mode = #tpu.pipeline_mode<synchronous>, transform_indices = @transform_4, window_bounds = array<i64: 1, 2, 32>}]} {
    %c0_i32 = arith.constant 0 : i32
    %0 = arith.cmpi eq, %arg0, %c0_i32 : i32
    %1 = arith.extui %0 : i1 to i32
    %c0_i32_0 = arith.constant 0 : i32
    %2 = arith.cmpi ne, %1, %c0_i32_0 : i32
    scf.if %2 {
      %cst_86 = arith.constant 0.000000e+00 : f32
      %270 = vector.broadcast %cst_86 : f32 to vector<1x2x32xf32>
      %c0_87 = arith.constant 0 : index
      %c0_88 = arith.constant 0 : index
      %c0_89 = arith.constant 0 : index
      %271 = vector.load %arg4[%c0_87, %c0_88, %c0_89] : memref<1x2x32xf32, #tpu.memory_space<vmem>>, vector<1x2x32xf32>
      tpu.vector_store %arg4[%c0_87, %c0_88, %c0_89], %270 {strides = array<i32>} : memref<1x2x32xf32, #tpu.memory_space<vmem>>, vector<1x2x32xf32>,
      %cst_90 = arith.constant 0.000000e+00 : f32
      %272 = vector.broadcast %cst_90 : f32 to vector<1x2x32xf32>
      %c0_91 = arith.constant 0 : index
      %c0_92 = arith.constant 0 : index
      %c0_93 = arith.constant 0 : index
      %273 = vector.load %arg5[%c0_91, %c0_92, %c0_93] : memref<1x2x32xf32, #tpu.memory_space<vmem>>, vector<1x2x32xf32>
      tpu.vector_store %arg5[%c0_91, %c0_92, %c0_93], %272 {strides = array<i32>} : memref<1x2x32xf32, #tpu.memory_space<vmem>>, vector<1x2x32xf32>,
    } else {
    }
    %c0 = arith.constant 0 : index
    %c0_1 = arith.constant 0 : index
    %3 = vector.load %arg2[%c0, %c0_1] : memref<32x128xbf16, #tpu.memory_space<vmem>>, vector<32x128xbf16>
    %c0_2 = arith.constant 0 : index
    %c0_3 = arith.constant 0 : index
    %c0_4 = arith.constant 0 : index
    %4 = vector.load %arg4[%c0_2, %c0_3, %c0_4] : memref<1x2x32xf32, #tpu.memory_space<vmem>>, vector<1x2x32xf32>
    %5 = vector.shape_cast %4 : vector<1x2x32xf32> to vector<2x32xf32>
    %c0_5 = arith.constant 0 : index
    %c0_6 = arith.constant 0 : index
    %c0_7 = arith.constant 0 : index
    %6 = vector.load %arg5[%c0_5, %c0_6, %c0_7] : memref<1x2x32xf32, #tpu.memory_space<vmem>>, vector<1x2x32xf32>
    %7 = vector.shape_cast %6 : vector<1x2x32xf32> to vector<2x32xf32>
    %c0_8 = arith.constant 0 : index
    %c0_9 = arith.constant 0 : index
    %c0_10 = arith.constant 0 : index
    %8 = vector.load %arg1[%c0_8, %c0_9, %c0_10] : memref<8x2x128xf32, #tpu.memory_space<vmem>>, vector<1x2x128xf32>
    %9 = vector.shape_cast %8 : vector<1x2x128xf32> to vector<2x128xf32>
    %10 = arith.truncf %5 : vector<2x32xf32> to vector<2x32xbf16>
    %cst = arith.constant dense<0.000000e+00> : vector<2x128xf32>
    %11 = tpu.matmul %10, %3, %cst {dimension_numbers = #tpu.dot_dimension_numbers<[1], [0], [0], [1], [0, 0, 1, 1], [], []>} : vector<2x32xbf16>, vector<32x128xbf16>, vector<2x128xf32> -> vector<2x128xf32>
    %12 = arith.addf %9, %11 : vector<2x128xf32>
    %13 = vector.extract_strided_slice %12 {offsets = [0, 0], sizes = [2, 32], strides = [1, 1]} : vector<2x128xf32> to vector<2x32xf32>
    %14 = arith.negf %13 : vector<2x32xf32>
    %15 = math.exp %14 : vector<2x32xf32>
    %cst_11 = arith.constant 1.000000e+00 : f32
    %16 = vector.broadcast %cst_11 : f32 to vector<2x32xf32>
    %17 = arith.addf %16, %15 : vector<2x32xf32>
    %18 = arith.divf %16, %17 : vector<2x32xf32>
    %19 = vector.extract_strided_slice %12 {offsets = [0, 32], sizes = [2, 32], strides = [1, 1]} : vector<2x128xf32> to vector<2x32xf32>
    %20 = arith.negf %19 : vector<2x32xf32>
    %21 = math.exp %20 : vector<2x32xf32>
    %cst_12 = arith.constant 1.000000e+00 : f32
    %22 = vector.broadcast %cst_12 : f32 to vector<2x32xf32>
    %23 = arith.addf %22, %21 : vector<2x32xf32>
    %24 = arith.divf %22, %23 : vector<2x32xf32>
    %25 = vector.extract_strided_slice %12 {offsets = [0, 64], sizes = [2, 32], strides = [1, 1]} : vector<2x128xf32> to vector<2x32xf32>
    %26 = math.tanh %25 : vector<2x32xf32>
    %27 = vector.extract_strided_slice %12 {offsets = [0, 96], sizes = [2, 32], strides = [1, 1]} : vector<2x128xf32> to vector<2x32xf32>
    %28 = arith.negf %27 : vector<2x32xf32>
    %29 = math.exp %28 : vector<2x32xf32>
    %cst_13 = arith.constant 1.000000e+00 : f32
    %30 = vector.broadcast %cst_13 : f32 to vector<2x32xf32>
    %31 = arith.addf %30, %29 : vector<2x32xf32>
    %32 = arith.divf %30, %31 : vector<2x32xf32>
    %33 = arith.mulf %24, %7 : vector<2x32xf32>
    %34 = arith.mulf %18, %26 : vector<2x32xf32>
    %35 = arith.addf %33, %34 : vector<2x32xf32>
    %36 = math.tanh %35 : vector<2x32xf32>
    %37 = arith.mulf %32, %36 : vector<2x32xf32>
    %38 = vector.shape_cast %37 : vector<2x32xf32> to vector<2x1x32xf32>
    %c0_14 = arith.constant 0 : index
    %c0_15 = arith.constant 0 : index
    %c0_16 = arith.constant 0 : index
    %39 = vector.load %arg3[%c0_14, %c0_15, %c0_16] : memref<2x8x32xf32, #tpu.memory_space<vmem>>, vector<2x1x32xf32>
    tpu.vector_store %arg3[%c0_14, %c0_15, %c0_16], %38 {strides = array<i32>} : memref<2x8x32xf32, #tpu.memory_space<vmem>>, vector<2x1x32xf32>,
    %c1 = arith.constant 1 : index
    %c0_17 = arith.constant 0 : index
    %c0_18 = arith.constant 0 : index
    %40 = vector.load %arg1[%c1, %c0_17, %c0_18] : memref<8x2x128xf32, #tpu.memory_space<vmem>>, vector<1x2x128xf32>
    %41 = vector.shape_cast %40 : vector<1x2x128xf32> to vector<2x128xf32>
    %42 = arith.truncf %37 : vector<2x32xf32> to vector<2x32xbf16>
    %cst_19 = arith.constant dense<0.000000e+00> : vector<2x128xf32>
    %43 = tpu.matmul %42, %3, %cst_19 {dimension_numbers = #tpu.dot_dimension_numbers<[1], [0], [0], [1], [0, 0, 1, 1], [], []>} : vector<2x32xbf16>, vector<32x128xbf16>, vector<2x128xf32> -> vector<2x128xf32>
    %44 = arith.addf %41, %43 : vector<2x128xf32>
    %45 = vector.extract_strided_slice %44 {offsets = [0, 0], sizes = [2, 32], strides = [1, 1]} : vector<2x128xf32> to vector<2x32xf32>
    %46 = arith.negf %45 : vector<2x32xf32>
    %47 = math.exp %46 : vector<2x32xf32>
    %cst_20 = arith.constant 1.000000e+00 : f32
    %48 = vector.broadcast %cst_20 : f32 to vector<2x32xf32>
    %49 = arith.addf %48, %47 : vector<2x32xf32>
    %50 = arith.divf %48, %49 : vector<2x32xf32>
    %51 = vector.extract_strided_slice %44 {offsets = [0, 32], sizes = [2, 32], strides = [1, 1]} : vector<2x128xf32> to vector<2x32xf32>
    %52 = arith.negf %51 : vector<2x32xf32>
    %53 = math.exp %52 : vector<2x32xf32>
    %cst_21 = arith.constant 1.000000e+00 : f32
    %54 = vector.broadcast %cst_21 : f32 to vector<2x32xf32>
    %55 = arith.addf %54, %53 : vector<2x32xf32>
    %56 = arith.divf %54, %55 : vector<2x32xf32>
    %57 = vector.extract_strided_slice %44 {offsets = [0, 64], sizes = [2, 32], strides = [1, 1]} : vector<2x128xf32> to vector<2x32xf32>
    %58 = math.tanh %57 : vector<2x32xf32>
    %59 = vector.extract_strided_slice %44 {offsets = [0, 96], sizes = [2, 32], strides = [1, 1]} : vector<2x128xf32> to vector<2x32xf32>
    %60 = arith.negf %59 : vector<2x32xf32>
    %61 = math.exp %60 : vector<2x32xf32>
    %cst_22 = arith.constant 1.000000e+00 : f32
    %62 = vector.broadcast %cst_22 : f32 to vector<2x32xf32>
    %63 = arith.addf %62, %61 : vector<2x32xf32>
    %64 = arith.divf %62, %63 : vector<2x32xf32>
    %65 = arith.mulf %56, %35 : vector<2x32xf32>
    %66 = arith.mulf %50, %58 : vector<2x32xf32>
    %67 = arith.addf %65, %66 : vector<2x32xf32>
    %68 = math.tanh %67 : vector<2x32xf32>
    %69 = arith.mulf %64, %68 : vector<2x32xf32>
    %70 = vector.shape_cast %69 : vector<2x32xf32> to vector<2x1x32xf32>
    %c0_23 = arith.constant 0 : index
    %c1_24 = arith.constant 1 : index
    %c0_25 = arith.constant 0 : index
    %71 = vector.load %arg3[%c0_23, %c1_24, %c0_25] : memref<2x8x32xf32, #tpu.memory_space<vmem>>, vector<2x1x32xf32>
    tpu.vector_store %arg3[%c0_23, %c1_24, %c0_25], %70 {strides = array<i32>} : memref<2x8x32xf32, #tpu.memory_space<vmem>>, vector<2x1x32xf32>,
    %c2 = arith.constant 2 : index
    %c0_26 = arith.constant 0 : index
    %c0_27 = arith.constant 0 : index
    %72 = vector.load %arg1[%c2, %c0_26, %c0_27] : memref<8x2x128xf32, #tpu.memory_space<vmem>>, vector<1x2x128xf32>
    %73 = vector.shape_cast %72 : vector<1x2x128xf32> to vector<2x128xf32>
    %74 = arith.truncf %69 : vector<2x32xf32> to vector<2x32xbf16>
    %cst_28 = arith.constant dense<0.000000e+00> : vector<2x128xf32>
    %75 = tpu.matmul %74, %3, %cst_28 {dimension_numbers = #tpu.dot_dimension_numbers<[1], [0], [0], [1], [0, 0, 1, 1], [], []>} : vector<2x32xbf16>, vector<32x128xbf16>, vector<2x128xf32> -> vector<2x128xf32>
    %76 = arith.addf %73, %75 : vector<2x128xf32>
    %77 = vector.extract_strided_slice %76 {offsets = [0, 0], sizes = [2, 32], strides = [1, 1]} : vector<2x128xf32> to vector<2x32xf32>
    %78 = arith.negf %77 : vector<2x32xf32>
    %79 = math.exp %78 : vector<2x32xf32>
    %cst_29 = arith.constant 1.000000e+00 : f32
    %80 = vector.broadcast %cst_29 : f32 to vector<2x32xf32>
    %81 = arith.addf %80, %79 : vector<2x32xf32>
    %82 = arith.divf %80, %81 : vector<2x32xf32>
    %83 = vector.extract_strided_slice %76 {offsets = [0, 32], sizes = [2, 32], strides = [1, 1]} : vector<2x128xf32> to vector<2x32xf32>
    %84 = arith.negf %83 : vector<2x32xf32>
    %85 = math.exp %84 : vector<2x32xf32>
    %cst_30 = arith.constant 1.000000e+00 : f32
    %86 = vector.broadcast %cst_30 : f32 to vector<2x32xf32>
    %87 = arith.addf %86, %85 : vector<2x32xf32>
    %88 = arith.divf %86, %87 : vector<2x32xf32>
    %89 = vector.extract_strided_slice %76 {offsets = [0, 64], sizes = [2, 32], strides = [1, 1]} : vector<2x128xf32> to vector<2x32xf32>
    %90 = math.tanh %89 : vector<2x32xf32>
    %91 = vector.extract_strided_slice %76 {offsets = [0, 96], sizes = [2, 32], strides = [1, 1]} : vector<2x128xf32> to vector<2x32xf32>
    %92 = arith.negf %91 : vector<2x32xf32>
    %93 = math.exp %92 : vector<2x32xf32>
    %cst_31 = arith.constant 1.000000e+00 : f32
    %94 = vector.broadcast %cst_31 : f32 to vector<2x32xf32>
    %95 = arith.addf %94, %93 : vector<2x32xf32>
    %96 = arith.divf %94, %95 : vector<2x32xf32>
    %97 = arith.mulf %88, %67 : vector<2x32xf32>
    %98 = arith.mulf %82, %90 : vector<2x32xf32>
    %99 = arith.addf %97, %98 : vector<2x32xf32>
    %100 = math.tanh %99 : vector<2x32xf32>
    %101 = arith.mulf %96, %100 : vector<2x32xf32>
    %102 = vector.shape_cast %101 : vector<2x32xf32> to vector<2x1x32xf32>
    %c0_32 = arith.constant 0 : index
    %c2_33 = arith.constant 2 : index
    %c0_34 = arith.constant 0 : index
    %103 = vector.load %arg3[%c0_32, %c2_33, %c0_34] : memref<2x8x32xf32, #tpu.memory_space<vmem>>, vector<2x1x32xf32>
    tpu.vector_store %arg3[%c0_32, %c2_33, %c0_34], %102 {strides = array<i32>} : memref<2x8x32xf32, #tpu.memory_space<vmem>>, vector<2x1x32xf32>,
    %c3 = arith.constant 3 : index
    %c0_35 = arith.constant 0 : index
    %c0_36 = arith.constant 0 : index
    %104 = vector.load %arg1[%c3, %c0_35, %c0_36] : memref<8x2x128xf32, #tpu.memory_space<vmem>>, vector<1x2x128xf32>
    %105 = vector.shape_cast %104 : vector<1x2x128xf32> to vector<2x128xf32>
    %106 = arith.truncf %101 : vector<2x32xf32> to vector<2x32xbf16>
    %cst_37 = arith.constant dense<0.000000e+00> : vector<2x128xf32>
    %107 = tpu.matmul %106, %3, %cst_37 {dimension_numbers = #tpu.dot_dimension_numbers<[1], [0], [0], [1], [0, 0, 1, 1], [], []>} : vector<2x32xbf16>, vector<32x128xbf16>, vector<2x128xf32> -> vector<2x128xf32>
    %108 = arith.addf %105, %107 : vector<2x128xf32>
    %109 = vector.extract_strided_slice %108 {offsets = [0, 0], sizes = [2, 32], strides = [1, 1]} : vector<2x128xf32> to vector<2x32xf32>
    %110 = arith.negf %109 : vector<2x32xf32>
    %111 = math.exp %110 : vector<2x32xf32>
    %cst_38 = arith.constant 1.000000e+00 : f32
    %112 = vector.broadcast %cst_38 : f32 to vector<2x32xf32>
    %113 = arith.addf %112, %111 : vector<2x32xf32>
    %114 = arith.divf %112, %113 : vector<2x32xf32>
    %115 = vector.extract_strided_slice %108 {offsets = [0, 32], sizes = [2, 32], strides = [1, 1]} : vector<2x128xf32> to vector<2x32xf32>
    %116 = arith.negf %115 : vector<2x32xf32>
    %117 = math.exp %116 : vector<2x32xf32>
    %cst_39 = arith.constant 1.000000e+00 : f32
    %118 = vector.broadcast %cst_39 : f32 to vector<2x32xf32>
    %119 = arith.addf %118, %117 : vector<2x32xf32>
    %120 = arith.divf %118, %119 : vector<2x32xf32>
    %121 = vector.extract_strided_slice %108 {offsets = [0, 64], sizes = [2, 32], strides = [1, 1]} : vector<2x128xf32> to vector<2x32xf32>
    %122 = math.tanh %121 : vector<2x32xf32>
    %123 = vector.extract_strided_slice %108 {offsets = [0, 96], sizes = [2, 32], strides = [1, 1]} : vector<2x128xf32> to vector<2x32xf32>
    %124 = arith.negf %123 : vector<2x32xf32>
    %125 = math.exp %124 : vector<2x32xf32>
    %cst_40 = arith.constant 1.000000e+00 : f32
    %126 = vector.broadcast %cst_40 : f32 to vector<2x32xf32>
    %127 = arith.addf %126, %125 : vector<2x32xf32>
    %128 = arith.divf %126, %127 : vector<2x32xf32>
    %129 = arith.mulf %120, %99 : vector<2x32xf32>
    %130 = arith.mulf %114, %122 : vector<2x32xf32>
    %131 = arith.addf %129, %130 : vector<2x32xf32>
    %132 = math.tanh %131 : vector<2x32xf32>
    %133 = arith.mulf %128, %132 : vector<2x32xf32>
    %134 = vector.shape_cast %133 : vector<2x32xf32> to vector<2x1x32xf32>
    %c0_41 = arith.constant 0 : index
    %c3_42 = arith.constant 3 : index
    %c0_43 = arith.constant 0 : index
    %135 = vector.load %arg3[%c0_41, %c3_42, %c0_43] : memref<2x8x32xf32, #tpu.memory_space<vmem>>, vector<2x1x32xf32>
    tpu.vector_store %arg3[%c0_41, %c3_42, %c0_43], %134 {strides = array<i32>} : memref<2x8x32xf32, #tpu.memory_space<vmem>>, vector<2x1x32xf32>,
    %c4 = arith.constant 4 : index
    %c0_44 = arith.constant 0 : index
    %c0_45 = arith.constant 0 : index
    %136 = vector.load %arg1[%c4, %c0_44, %c0_45] : memref<8x2x128xf32, #tpu.memory_space<vmem>>, vector<1x2x128xf32>
    %137 = vector.shape_cast %136 : vector<1x2x128xf32> to vector<2x128xf32>
    %138 = arith.truncf %133 : vector<2x32xf32> to vector<2x32xbf16>
    %cst_46 = arith.constant dense<0.000000e+00> : vector<2x128xf32>
    %139 = tpu.matmul %138, %3, %cst_46 {dimension_numbers = #tpu.dot_dimension_numbers<[1], [0], [0], [1], [0, 0, 1, 1], [], []>} : vector<2x32xbf16>, vector<32x128xbf16>, vector<2x128xf32> -> vector<2x128xf32>
    %140 = arith.addf %137, %139 : vector<2x128xf32>
    %141 = vector.extract_strided_slice %140 {offsets = [0, 0], sizes = [2, 32], strides = [1, 1]} : vector<2x128xf32> to vector<2x32xf32>
    %142 = arith.negf %141 : vector<2x32xf32>
    %143 = math.exp %142 : vector<2x32xf32>
    %cst_47 = arith.constant 1.000000e+00 : f32
    %144 = vector.broadcast %cst_47 : f32 to vector<2x32xf32>
    %145 = arith.addf %144, %143 : vector<2x32xf32>
    %146 = arith.divf %144, %145 : vector<2x32xf32>
    %147 = vector.extract_strided_slice %140 {offsets = [0, 32], sizes = [2, 32], strides = [1, 1]} : vector<2x128xf32> to vector<2x32xf32>
    %148 = arith.negf %147 : vector<2x32xf32>
    %149 = math.exp %148 : vector<2x32xf32>
    %cst_48 = arith.constant 1.000000e+00 : f32
    %150 = vector.broadcast %cst_48 : f32 to vector<2x32xf32>
    %151 = arith.addf %150, %149 : vector<2x32xf32>
    %152 = arith.divf %150, %151 : vector<2x32xf32>
    %153 = vector.extract_strided_slice %140 {offsets = [0, 64], sizes = [2, 32], strides = [1, 1]} : vector<2x128xf32> to vector<2x32xf32>
    %154 = math.tanh %153 : vector<2x32xf32>
    %155 = vector.extract_strided_slice %140 {offsets = [0, 96], sizes = [2, 32], strides = [1, 1]} : vector<2x128xf32> to vector<2x32xf32>
    %156 = arith.negf %155 : vector<2x32xf32>
    %157 = math.exp %156 : vector<2x32xf32>
    %cst_49 = arith.constant 1.000000e+00 : f32
    %158 = vector.broadcast %cst_49 : f32 to vector<2x32xf32>
    %159 = arith.addf %158, %157 : vector<2x32xf32>
    %160 = arith.divf %158, %159 : vector<2x32xf32>
    %161 = arith.mulf %152, %131 : vector<2x32xf32>
    %162 = arith.mulf %146, %154 : vector<2x32xf32>
    %163 = arith.addf %161, %162 : vector<2x32xf32>
    %164 = math.tanh %163 : vector<2x32xf32>
    %165 = arith.mulf %160, %164 : vector<2x32xf32>
    %166 = vector.shape_cast %165 : vector<2x32xf32> to vector<2x1x32xf32>
    %c0_50 = arith.constant 0 : index
    %c4_51 = arith.constant 4 : index
    %c0_52 = arith.constant 0 : index
    %167 = vector.load %arg3[%c0_50, %c4_51, %c0_52] : memref<2x8x32xf32, #tpu.memory_space<vmem>>, vector<2x1x32xf32>
    tpu.vector_store %arg3[%c0_50, %c4_51, %c0_52], %166 {strides = array<i32>} : memref<2x8x32xf32, #tpu.memory_space<vmem>>, vector<2x1x32xf32>,
    %c5 = arith.constant 5 : index
    %c0_53 = arith.constant 0 : index
    %c0_54 = arith.constant 0 : index
    %168 = vector.load %arg1[%c5, %c0_53, %c0_54] : memref<8x2x128xf32, #tpu.memory_space<vmem>>, vector<1x2x128xf32>
    %169 = vector.shape_cast %168 : vector<1x2x128xf32> to vector<2x128xf32>
    %170 = arith.truncf %165 : vector<2x32xf32> to vector<2x32xbf16>
    %cst_55 = arith.constant dense<0.000000e+00> : vector<2x128xf32>
    %171 = tpu.matmul %170, %3, %cst_55 {dimension_numbers = #tpu.dot_dimension_numbers<[1], [0], [0], [1], [0, 0, 1, 1], [], []>} : vector<2x32xbf16>, vector<32x128xbf16>, vector<2x128xf32> -> vector<2x128xf32>
    %172 = arith.addf %169, %171 : vector<2x128xf32>
    %173 = vector.extract_strided_slice %172 {offsets = [0, 0], sizes = [2, 32], strides = [1, 1]} : vector<2x128xf32> to vector<2x32xf32>
    %174 = arith.negf %173 : vector<2x32xf32>
    %175 = math.exp %174 : vector<2x32xf32>
    %cst_56 = arith.constant 1.000000e+00 : f32
    %176 = vector.broadcast %cst_56 : f32 to vector<2x32xf32>
    %177 = arith.addf %176, %175 : vector<2x32xf32>
    %178 = arith.divf %176, %177 : vector<2x32xf32>
    %179 = vector.extract_strided_slice %172 {offsets = [0, 32], sizes = [2, 32], strides = [1, 1]} : vector<2x128xf32> to vector<2x32xf32>
    %180 = arith.negf %179 : vector<2x32xf32>
    %181 = math.exp %180 : vector<2x32xf32>
    %cst_57 = arith.constant 1.000000e+00 : f32
    %182 = vector.broadcast %cst_57 : f32 to vector<2x32xf32>
    %183 = arith.addf %182, %181 : vector<2x32xf32>
    %184 = arith.divf %182, %183 : vector<2x32xf32>
    %185 = vector.extract_strided_slice %172 {offsets = [0, 64], sizes = [2, 32], strides = [1, 1]} : vector<2x128xf32> to vector<2x32xf32>
    %186 = math.tanh %185 : vector<2x32xf32>
    %187 = vector.extract_strided_slice %172 {offsets = [0, 96], sizes = [2, 32], strides = [1, 1]} : vector<2x128xf32> to vector<2x32xf32>
    %188 = arith.negf %187 : vector<2x32xf32>
    %189 = math.exp %188 : vector<2x32xf32>
    %cst_58 = arith.constant 1.000000e+00 : f32
    %190 = vector.broadcast %cst_58 : f32 to vector<2x32xf32>
    %191 = arith.addf %190, %189 : vector<2x32xf32>
    %192 = arith.divf %190, %191 : vector<2x32xf32>
    %193 = arith.mulf %184, %163 : vector<2x32xf32>
    %194 = arith.mulf %178, %186 : vector<2x32xf32>
    %195 = arith.addf %193, %194 : vector<2x32xf32>
    %196 = math.tanh %195 : vector<2x32xf32>
    %197 = arith.mulf %192, %196 : vector<2x32xf32>
    %198 = vector.shape_cast %197 : vector<2x32xf32> to vector<2x1x32xf32>
    %c0_59 = arith.constant 0 : index
    %c5_60 = arith.constant 5 : index
    %c0_61 = arith.constant 0 : index
    %199 = vector.load %arg3[%c0_59, %c5_60, %c0_61] : memref<2x8x32xf32, #tpu.memory_space<vmem>>, vector<2x1x32xf32>
    tpu.vector_store %arg3[%c0_59, %c5_60, %c0_61], %198 {strides = array<i32>} : memref<2x8x32xf32, #tpu.memory_space<vmem>>, vector<2x1x32xf32>,
    %c6 = arith.constant 6 : index
    %c0_62 = arith.constant 0 : index
    %c0_63 = arith.constant 0 : index
    %200 = vector.load %arg1[%c6, %c0_62, %c0_63] : memref<8x2x128xf32, #tpu.memory_space<vmem>>, vector<1x2x128xf32>
    %201 = vector.shape_cast %200 : vector<1x2x128xf32> to vector<2x128xf32>
    %202 = arith.truncf %197 : vector<2x32xf32> to vector<2x32xbf16>
    %cst_64 = arith.constant dense<0.000000e+00> : vector<2x128xf32>
    %203 = tpu.matmul %202, %3, %cst_64 {dimension_numbers = #tpu.dot_dimension_numbers<[1], [0], [0], [1], [0, 0, 1, 1], [], []>} : vector<2x32xbf16>, vector<32x128xbf16>, vector<2x128xf32> -> vector<2x128xf32>
    %204 = arith.addf %201, %203 : vector<2x128xf32>
    %205 = vector.extract_strided_slice %204 {offsets = [0, 0], sizes = [2, 32], strides = [1, 1]} : vector<2x128xf32> to vector<2x32xf32>
    %206 = arith.negf %205 : vector<2x32xf32>
    %207 = math.exp %206 : vector<2x32xf32>
    %cst_65 = arith.constant 1.000000e+00 : f32
    %208 = vector.broadcast %cst_65 : f32 to vector<2x32xf32>
    %209 = arith.addf %208, %207 : vector<2x32xf32>
    %210 = arith.divf %208, %209 : vector<2x32xf32>
    %211 = vector.extract_strided_slice %204 {offsets = [0, 32], sizes = [2, 32], strides = [1, 1]} : vector<2x128xf32> to vector<2x32xf32>
    %212 = arith.negf %211 : vector<2x32xf32>
    %213 = math.exp %212 : vector<2x32xf32>
    %cst_66 = arith.constant 1.000000e+00 : f32
    %214 = vector.broadcast %cst_66 : f32 to vector<2x32xf32>
    %215 = arith.addf %214, %213 : vector<2x32xf32>
    %216 = arith.divf %214, %215 : vector<2x32xf32>
    %217 = vector.extract_strided_slice %204 {offsets = [0, 64], sizes = [2, 32], strides = [1, 1]} : vector<2x128xf32> to vector<2x32xf32>
    %218 = math.tanh %217 : vector<2x32xf32>
    %219 = vector.extract_strided_slice %204 {offsets = [0, 96], sizes = [2, 32], strides = [1, 1]} : vector<2x128xf32> to vector<2x32xf32>
    %220 = arith.negf %219 : vector<2x32xf32>
    %221 = math.exp %220 : vector<2x32xf32>
    %cst_67 = arith.constant 1.000000e+00 : f32
    %222 = vector.broadcast %cst_67 : f32 to vector<2x32xf32>
    %223 = arith.addf %222, %221 : vector<2x32xf32>
    %224 = arith.divf %222, %223 : vector<2x32xf32>
    %225 = arith.mulf %216, %195 : vector<2x32xf32>
    %226 = arith.mulf %210, %218 : vector<2x32xf32>
    %227 = arith.addf %225, %226 : vector<2x32xf32>
    %228 = math.tanh %227 : vector<2x32xf32>
    %229 = arith.mulf %224, %228 : vector<2x32xf32>
    %230 = vector.shape_cast %229 : vector<2x32xf32> to vector<2x1x32xf32>
    %c0_68 = arith.constant 0 : index
    %c6_69 = arith.constant 6 : index
    %c0_70 = arith.constant 0 : index
    %231 = vector.load %arg3[%c0_68, %c6_69, %c0_70] : memref<2x8x32xf32, #tpu.memory_space<vmem>>, vector<2x1x32xf32>
    tpu.vector_store %arg3[%c0_68, %c6_69, %c0_70], %230 {strides = array<i32>} : memref<2x8x32xf32, #tpu.memory_space<vmem>>, vector<2x1x32xf32>,
    %c7 = arith.constant 7 : index
    %c0_71 = arith.constant 0 : index
    %c0_72 = arith.constant 0 : index
    %232 = vector.load %arg1[%c7, %c0_71, %c0_72] : memref<8x2x128xf32, #tpu.memory_space<vmem>>, vector<1x2x128xf32>
    %233 = vector.shape_cast %232 : vector<1x2x128xf32> to vector<2x128xf32>
    %234 = arith.truncf %229 : vector<2x32xf32> to vector<2x32xbf16>
    %cst_73 = arith.constant dense<0.000000e+00> : vector<2x128xf32>
    %235 = tpu.matmul %234, %3, %cst_73 {dimension_numbers = #tpu.dot_dimension_numbers<[1], [0], [0], [1], [0, 0, 1, 1], [], []>} : vector<2x32xbf16>, vector<32x128xbf16>, vector<2x128xf32> -> vector<2x128xf32>
    %236 = arith.addf %233, %235 : vector<2x128xf32>
    %237 = vector.extract_strided_slice %236 {offsets = [0, 0], sizes = [2, 32], strides = [1, 1]} : vector<2x128xf32> to vector<2x32xf32>
    %238 = arith.negf %237 : vector<2x32xf32>
    %239 = math.exp %238 : vector<2x32xf32>
    %cst_74 = arith.constant 1.000000e+00 : f32
    %240 = vector.broadcast %cst_74 : f32 to vector<2x32xf32>
    %241 = arith.addf %240, %239 : vector<2x32xf32>
    %242 = arith.divf %240, %241 : vector<2x32xf32>
    %243 = vector.extract_strided_slice %236 {offsets = [0, 32], sizes = [2, 32], strides = [1, 1]} : vector<2x128xf32> to vector<2x32xf32>
    %244 = arith.negf %243 : vector<2x32xf32>
    %245 = math.exp %244 : vector<2x32xf32>
    %cst_75 = arith.constant 1.000000e+00 : f32
    %246 = vector.broadcast %cst_75 : f32 to vector<2x32xf32>
    %247 = arith.addf %246, %245 : vector<2x32xf32>
    %248 = arith.divf %246, %247 : vector<2x32xf32>
    %249 = vector.extract_strided_slice %236 {offsets = [0, 64], sizes = [2, 32], strides = [1, 1]} : vector<2x128xf32> to vector<2x32xf32>
    %250 = math.tanh %249 : vector<2x32xf32>
    %251 = vector.extract_strided_slice %236 {offsets = [0, 96], sizes = [2, 32], strides = [1, 1]} : vector<2x128xf32> to vector<2x32xf32>
    %252 = arith.negf %251 : vector<2x32xf32>
    %253 = math.exp %252 : vector<2x32xf32>
    %cst_76 = arith.constant 1.000000e+00 : f32
    %254 = vector.broadcast %cst_76 : f32 to vector<2x32xf32>
    %255 = arith.addf %254, %253 : vector<2x32xf32>
    %256 = arith.divf %254, %255 : vector<2x32xf32>
    %257 = arith.mulf %248, %227 : vector<2x32xf32>
    %258 = arith.mulf %242, %250 : vector<2x32xf32>
    %259 = arith.addf %257, %258 : vector<2x32xf32>
    %260 = math.tanh %259 : vector<2x32xf32>
    %261 = arith.mulf %256, %260 : vector<2x32xf32>
    %262 = vector.shape_cast %261 : vector<2x32xf32> to vector<2x1x32xf32>
    %c0_77 = arith.constant 0 : index
    %c7_78 = arith.constant 7 : index
    %c0_79 = arith.constant 0 : index
    %263 = vector.load %arg3[%c0_77, %c7_78, %c0_79] : memref<2x8x32xf32, #tpu.memory_space<vmem>>, vector<2x1x32xf32>
    tpu.vector_store %arg3[%c0_77, %c7_78, %c0_79], %262 {strides = array<i32>} : memref<2x8x32xf32, #tpu.memory_space<vmem>>, vector<2x1x32xf32>,
    %c0_80 = arith.constant 0 : index
    %c0_81 = arith.constant 0 : index
    %c0_82 = arith.constant 0 : index
    %264 = vector.load %arg4[%c0_80, %c0_81, %c0_82] : memref<1x2x32xf32, #tpu.memory_space<vmem>>, vector<1x2x32xf32>
    %265 = vector.shape_cast %264 : vector<1x2x32xf32> to vector<2x32xf32>
    %266 = vector.shape_cast %261 : vector<2x32xf32> to vector<1x2x32xf32>
    tpu.vector_store %arg4[%c0_80, %c0_81, %c0_82], %266 {strides = array<i32>} : memref<1x2x32xf32, #tpu.memory_space<vmem>>, vector<1x2x32xf32>,
    %c0_83 = arith.constant 0 : index
    %c0_84 = arith.constant 0 : index
    %c0_85 = arith.constant 0 : index
    %267 = vector.load %arg5[%c0_83, %c0_84, %c0_85] : memref<1x2x32xf32, #tpu.memory_space<vmem>>, vector<1x2x32xf32>
    %268 = vector.shape_cast %267 : vector<1x2x32xf32> to vector<2x32xf32>
    %269 = vector.shape_cast %259 : vector<2x32xf32> to vector<1x2x32xf32>
    tpu.vector_store %arg5[%c0_83, %c0_84, %c0_85], %269 {strides = array<i32>} : memref<1x2x32xf32, #tpu.memory_space<vmem>>, vector<1x2x32xf32>,
    return
  }
  func.func @transform_0(%arg0: i32) -> (i32, i32, i32) {
    %c0_i32 = arith.constant 0 : i32
    %c0_i32_0 = arith.constant 0 : i32
    %c0_i32_1 = arith.constant 0 : i32
    return %arg0, %c0_i32, %c0_i32_0 : i32, i32, i32
  }
  func.func @transform_1(%arg0: i32) -> (i32, i32) {
    %c0_i32 = arith.constant 0 : i32
    %c0_i32_0 = arith.constant 0 : i32
    %c0_i32_1 = arith.constant 0 : i32
    return %c0_i32, %c0_i32_0 : i32, i32
  }
  func.func @transform_2(%arg0: i32) -> (i32, i32, i32) {
    %c0_i32 = arith.constant 0 : i32
    %c0_i32_0 = arith.constant 0 : i32
    %c0_i32_1 = arith.constant 0 : i32
    return %c0_i32, %arg0, %c0_i32_0 : i32, i32, i32
  }
  func.func @transform_3(%arg0: i32) -> (i32, i32, i32) {
    %c0_i32 = arith.constant 0 : i32
    %c0_i32_0 = arith.constant 0 : i32
    %c0_i32_1 = arith.constant 0 : i32
    %c0_i32_2 = arith.constant 0 : i32
    return %c0_i32, %c0_i32_0, %c0_i32_1 : i32, i32, i32
  }
  func.func @transform_4(%arg0: i32) -> (i32, i32, i32) {
    %c0_i32 = arith.constant 0 : i32
    %c0_i32_0 = arith.constant 0 : i32
    %c0_i32_1 = arith.constant 0 : i32
    %c0_i32_2 = arith.constant 0 : i32
    return %c0_i32, %c0_i32_0, %c0_i32_1 : i32, i32, i32
  }
}

</mosaic_0001>

<llo_original>
// kernel: run.1
$region0: #{run.1}
  #allocation0 [shape = 'u32[]', space=smem, size = 0x4, offset = 0x4, fixed_abs, tag = 'smem constant byte address 0x4 - core index']
  #allocation1 [shape = 'u32[144,128]{1,0:T(1,128)}', space=vmem, size = 0x12000, scoped, tag = 'internal scratch']
  %s0 = inlined_call_operand.vmem [shape: f32[16,2,128], index: 0, kind: input, shape index: {}]
  %s1 = inlined_call_operand.vmem [shape: bf16[32,128], index: 1, kind: input, shape index: {}]
  %s2 = inlined_call_operand.hbm [shape: f32[2,16,32], index: 2, kind: output, shape index: {0}]
  %s3 = inlined_call_operand.hbm [shape: f32[1,2,32], index: 3, kind: output, shape index: {1}]
  %s4 = inlined_call_operand.hbm [shape: f32[1,2,32], index: 4, kind: output, shape index: {2}]
  %5 = xla_tuple %s2, %s3, %s4
  %s6 = sld [smem:[#allocation0]]
  $region61: #{run.1} parent=0
    _
  %s8 = ssub.s32 1, %s6
  %s9 = scalar_select 0, %s8, %s6
  $region1: #{run.1} parent=0
    #allocation2 [shape = 'u8[16384]{0}', space=vmem, size = 0x4000, scoped, tag = 'output window, operand 0']
    #allocation3 [shape = 's32[2]{0}', space=sflag, size = 0x8, scoped, tag = 'scoped memory for run.1']
    #allocation4 [shape = 'u8[1024]{0}', space=vmem, size = 0x400, scoped, tag = 'output window, operand 1, single buffered']
    #allocation5 [shape = 's32[1]{0}', space=sflag, size = 0x4, scoped, tag = 'scoped memory for run.1']
    #allocation6 [shape = 'u8[1024]{0}', space=vmem, size = 0x400, scoped, tag = 'output window, operand 2, single buffered']
    %10 = vsyncpa [#allocation3], 0
    %s11 = scalar_lea.sflag [#allocation3], 1
    %12 = vsyncpa %s11, 0
    %13 = vsyncpa [#allocation5], 0
    loop: start=0, step=1, limit=4
    $region2: #{run.1} parent=1 // loop_pre_header
      _
    $region3: #{run.1} parent=1 // loop_header
      %s15 = sphi 0, %s19
      %p16 = scmp.ge.s32.totalorder %s15, 4
      %s25 = sphi 0, %s27
      %s28 = sphi 0, %s25
      %s29 = sphi 0, %s28
      %s45 = sphi 0, %s29
      %s49 = sphi 0, %s49
      %s51 = sphi 0, %s49
      %s52 = sphi 0, %s51
      %s66 = sphi 0, %s52
      %s72 = sphi 0, %s74
      %s75 = sphi 0, %s72
      %s76 = sphi 0, %s75
      %s92 = sphi 0, %s76
      %s96 = sphi 0, %s96
      %s98 = sphi 0, %s96
      %s99 = sphi 0, %s98
      %s113 = sphi 0, %s99
      %s117 = sphi 0, %s117
      %s119 = sphi 0, %s117
      %s120 = sphi 0, %s119
      %s134 = sphi 0, %s120
    $region4: #{run.1} parent=1 // loop_header_branch
      %18 = sbr.rel (%p16) target = $region8
    $region5: #{run.1} parent=1 // loop_body
      %s20 = ssub.s32 %s15, 1
      %s21 = ssub.s32 %s15, 2
      %s22 = sadd.s32 %s15, 1
      %s23 = ssub.s32 %s15, %s22
      %p24 = scmp.eq.s32.totalorder %s23, 0
      %s26 = sadd.s32 %s25, 1
      %s27 = scalar_select %p24, %s25, %s26
      %p30 = pneg %p24
      %p31 = scmp.eq.s32.totalorder %s15, 1
      %p32 = por %p30, %p31
      %p33 = scmp.ne.s32.totalorder %s25, %s28
      %p34 = scmp.eq.s32.totalorder %s15, 0
      %p35 = por %p33, %p34
      %p36 = scmp.ne.s32.totalorder %s25, %s28
      %p37 = scmp.eq.s32.totalorder %s20, 1
      %p38 = por %p36, %p37
      %p39 = scmp.ne.s32.totalorder %s28, %s29
      %p40 = scmp.eq.s32.totalorder %s20, 0
      %p41 = por %p39, %p40
      %p42 = scmp.ne.s32.totalorder %s28, %s29
      %p43 = scmp.eq.s32.totalorder %s21, 1
      %p44 = por %p42, %p43
      %p46 = scmp.ne.s32.totalorder %s29, %s45
      %p47 = scmp.eq.s32.totalorder %s21, 0
      %p48 = por %p46, %p47
      %s50 = sadd.s32 %s49, 1
      %p53 = scmp.eq.s32.totalorder %s15, 1
      %p54 = scmp.ne.s32.totalorder %s49, %s51
      %p55 = scmp.eq.s32.totalorder %s15, 0
      %p56 = por %p54, %p55
      %p57 = scmp.ne.s32.totalorder %s49, %s51
      %p58 = scmp.eq.s32.totalorder %s20, 1
      %p59 = por %p57, %p58
      %p60 = scmp.ne.s32.totalorder %s51, %s52
      %p61 = scmp.eq.s32.totalorder %s20, 0
      %p62 = por %p60, %p61
      %p63 = scmp.ne.s32.totalorder %s51, %s52
      %p64 = scmp.eq.s32.totalorder %s21, 1
      %p65 = por %p63, %p64
      %p67 = scmp.ne.s32.totalorder %s52, %s66
      %p68 = scmp.eq.s32.totalorder %s21, 0
      %p69 = por %p67, %p68
      %s70 = ssub.s32 %s15, %s22
      %p71 = scmp.eq.s32.totalorder %s70, 0
      %s73 = sadd.s32 %s72, 1
      %s74 = scalar_select %p71, %s72, %s73
      %p77 = pneg %p71
      %p78 = scmp.eq.s32.totalorder %s15, 1
      %p79 = por %p77, %p78
      %p80 = scmp.ne.s32.totalorder %s72, %s75
      %p81 = scmp.eq.s32.totalorder %s15, 0
      %p82 = por %p80, %p81
      %p83 = scmp.ne.s32.totalorder %s72, %s75
      %p84 = scmp.eq.s32.totalorder %s20, 1
      %p85 = por %p83, %p84
      %p86 = scmp.ne.s32.totalorder %s75, %s76
      %p87 = scmp.eq.s32.totalorder %s20, 0
      %p88 = por %p86, %p87
      %p89 = scmp.ne.s32.totalorder %s75, %s76
      %p90 = scmp.eq.s32.totalorder %s21, 1
      %p91 = por %p89, %p90
      %p93 = scmp.ne.s32.totalorder %s76, %s92
      %p94 = scmp.eq.s32.totalorder %s21, 0
      %p95 = por %p93, %p94
      %s97 = sadd.s32 %s96, 1
      %p100 = scmp.eq.s32.totalorder %s15, 1
      %p101 = scmp.ne.s32.totalorder %s96, %s98
      %p102 = scmp.eq.s32.totalorder %s15, 0
      %p103 = por %p101, %p102
      %p104 = scmp.ne.s32.totalorder %s96, %s98
      %p105 = scmp.eq.s32.totalorder %s20, 1
      %p106 = por %p104, %p105
      %p107 = scmp.ne.s32.totalorder %s98, %s99
      %p108 = scmp.eq.s32.totalorder %s20, 0
      %p109 = por %p107, %p108
      %p110 = scmp.ne.s32.totalorder %s98, %s99
      %p111 = scmp.eq.s32.totalorder %s21, 1
      %p112 = por %p110, %p111
      %p114 = scmp.ne.s32.totalorder %s99, %s113
      %p115 = scmp.eq.s32.totalorder %s21, 0
      %p116 = por %p114, %p115
      %s118 = sadd.s32 %s117, 1
      %p121 = scmp.eq.s32.totalorder %s15, 1
      %p122 = scmp.ne.s32.totalorder %s117, %s119
      %p123 = scmp.eq.s32.totalorder %s15, 0
      %p124 = por %p122, %p123
      %p125 = scmp.ne.s32.totalorder %s117, %s119
      %p126 = scmp.eq.s32.totalorder %s20, 1
      %p127 = por %p125, %p126
      %p128 = scmp.ne.s32.totalorder %s119, %s120
      %p129 = scmp.eq.s32.totalorder %s20, 0
      %p130 = por %p128, %p129
      %p131 = scmp.ne.s32.totalorder %s119, %s120
      %p132 = scmp.eq.s32.totalorder %s21, 1
      %p133 = por %p131, %p132
      %p135 = scmp.ne.s32.totalorder %s120, %s134
      %p136 = scmp.eq.s32.totalorder %s21, 0
      %p137 = por %p135, %p136
      %p138 = scmp.le.s32.totalorder 1, %s15
      %p139 = scmp.lt.s32.totalorder %s15, 3
      %p140 = pnand %p138, %p139
      %p141 = pneg %p140
      // Predicated region
      $region9: #{run.1} parent=5 // pred_check
        _
      $region10: #{run.1} parent=5 // pred_check_branch
        %143 = sbr.rel (%p140) target = $region12
      $region11: #{run.1} parent=5 // pred_region
        %s144 = ssub.s32 %s15, 1
        // Predicated region
        $region13: #{run.1} parent=11 // pred_check
          %p145 = pneg %p62
        $region14: #{run.1} parent=11 // pred_check_branch
          %147 = sbr.rel (%p145) target = $region16
        $region15: #{run.1} parent=11 // pred_region
          _
        $region16: #{run.1} parent=11 // pred_fallthru
          _
      $region12: #{run.1} parent=5 // pred_fallthru
        _
      %p148 = scmp.lt.s32.totalorder %s15, 2
      // Predicated region
      $region17: #{run.1} parent=5 // pred_check
        %p149 = pneg %p148
      $region18: #{run.1} parent=5 // pred_check_branch
        %151 = sbr.rel (%p149) target = $region20
      $region19: #{run.1} parent=5 // pred_region
        // Predicated region
        $region21: #{run.1} parent=19 // pred_check
          %p152 = pneg %p35
        $region22: #{run.1} parent=19 // pred_check_branch
          %154 = sbr.rel (%p152) target = $region24
        $region23: #{run.1} parent=19 // pred_region
          %s155 = smul.u32 8, %s15
          %p156 = scmp.lt.s32.totalorder %s155, 15
          %s157 = scalar_select %p156, %s155, 15
          %s158 = smul.addr %s157, 2
          %s159 = scalar_lea.vmem %s0, %s158
          %s160 = smul.u32 8, %s15
        $region24: #{run.1} parent=19 // pred_fallthru
          _
      $region20: #{run.1} parent=5 // pred_fallthru
        _
      %p161 = scmp.le.s32.totalorder 1, %s15
      %p162 = scmp.lt.s32.totalorder %s15, 3
      %p163 = pnand %p161, %p162
      %p164 = pneg %p163
      // Predicated region
      $region25: #{run.1} parent=5 // pred_check
        _
      $region26: #{run.1} parent=5 // pred_check_branch
        %166 = sbr.rel (%p163) target = $region28
      $region27: #{run.1} parent=5 // pred_region
        %s167 = ssub.s32 %s15, 1
        %s168 = smul.u32 8, %s20
        %p169 = scmp.lt.s32.totalorder %s168, 15
        %s170 = scalar_select %p169, %s168, 15
        %s171 = smul.addr %s170, 2
        %s172 = scalar_lea.vmem %s0, %s171
        %p173 = pneg %p41
        %p174 = pneg %p38
        %p175 = pneg %p62
        %p176 = pneg %p59
        %p177 = pneg %p88
        %p178 = pneg %p85
        %s179 = sand.u32 %s75, 1
        %s180 = scalar_lea.sflag [#allocation3], %s179
        %s181 = sand.u32 %s75, 1
        %s182 = smul.addr %s181, 16
        %s183 = scalar_lea.vmem [#allocation2], %s182
        %p184 = pneg %p109
        %p185 = pneg %p106
        %p186 = pneg %p130
        %p187 = pneg %p127
        %s188 = smul.u32 8, %s20
        %p189 = scmp.lt.s32.totalorder %s188, 15
        %s190 = scalar_select %p189, %s188, 15
        %s191 = smul.addr %s190, 2
        %s192 = scalar_lea.vmem %s0, %s191
        %s193 = smul.u32 8, %s20
        %p195 = scmp.eq.s32.totalorder %s20, 0
        // Predicated region
        $region29: #{run.1} parent=27 // pred_check
          %p196 = pneg %p195
        $region30: #{run.1} parent=27 // pred_check_branch
          %198 = sbr.rel (%p196) target = $region32
        $region31: #{run.1} parent=27 // pred_region
          %vm199 = vcmask 254976
          %200 = vst.msk [vmem:[#allocation4] sm:$0x3] %vm199, 0.0
          %201 = vst.msk [vmem:[#allocation6] sm:$0x3] %vm199, 0.0
        $region32: #{run.1} parent=27 // pred_fallthru
          _
        %v202 = vld [vmem:[%s1] sm:$0xf]
        %v203 = vld [vmem:[%s1 + $0x4] sm:$0xf]
        %v204 = vld [vmem:[%s1 + $0x8] sm:$0xf]
        %v205 = vld [vmem:[%s1 + $0xc] sm:$0xf]
        %v206 = vld [vmem:[#allocation4] sm:$0x3]
        %v207 = vld [vmem:[#allocation6] sm:$0x3]
        %v208 = vld [vmem:[%s192] sm:$0x3]
        %v209 = vpack.c.bf16 %v206, %v206
        %v214 = vunpack.c.l.b16 %v202
        %v215 = vunpack.c.l.b16 %v203
        %v216 = vunpack.c.l.b16 %v204
        %v217 = vunpack.c.l.b16 %v205
        %v218 = vpack.c.b16 %v215, %v214
        %v219 = vpack.c.b16 %v217, %v216
        %vm222 = vcmask 261120
        %v224 = vsel %vm222, %v209, 0
        %226 = vmatprep.subr.bf16.mxu0 0
        %227 = vmatpush1.bf16.msra.mxu0 %v218
        %228 = vmatprep.subr.bf16.mxu0 0
        %229 = vmatpush1.bf16.msra.mxu0 %v219
        %230 = vmatprep.subr.bf16.mxu0 0
        %231 = vmatpush1.bf16.msra.mxu0 0
        %232 = vmatprep.subr.bf16.mxu0 0
        %233 = vmatpush1.bf16.msra.mxu0 0
        %234 = vmatprep.subr.bf16.mxu0 0
        %235 = vmatpush1.bf16.msra.mxu0 0
        %236 = vmatprep.subr.bf16.mxu0 0
        %237 = vmatpush1.bf16.msra.mxu0 0
        %238 = vmatprep.subr.bf16.mxu0 0
        %239 = vmatpush1.bf16.msra.mxu0 0
        %240 = vmatprep.subr.bf16.mxu0 0
        %241 = vmatpush1.bf16.msra.mxu0 0
        %242 = vmatprep.subr.bf16.mxu0 0
        %243 = vmatpush1.bf16.msra.mxu0 0
        %244 = vmatprep.subr.bf16.mxu0 0
        %245 = vmatpush1.bf16.msra.mxu0 0
        %246 = vmatprep.subr.bf16.mxu0 0
        %247 = vmatpush1.bf16.msra.mxu0 0
        %248 = vmatprep.subr.bf16.mxu0 0
        %249 = vmatpush1.bf16.msra.mxu0 0
        %250 = vmatprep.subr.bf16.mxu0 0
        %251 = vmatpush1.bf16.msra.mxu0 0
        %252 = vmatprep.subr.bf16.mxu0 0
        %253 = vmatpush1.bf16.msra.mxu0 0
        %254 = vmatprep.subr.bf16.mxu0 0
        %255 = vmatpush1.bf16.msra.mxu0 0
        %256 = vmatprep.subr.bf16.mxu0 0
        %257 = vmatpush1.bf16.msra.mxu0 0
        %258 = vmatprep.mubr.bf16.mxu0 0
        %259 = vmatmul.mubr.bf16.gmra.mrb[0].mxu0 %v224
        %v260 = vpop.f32.mrb[0].mxu0
        %v261 = vadd.f32 0.0, %v260
        %v262 = vpop.f32.mrb[0].mxu0
        %v263 = vpop.f32.mrb[0].mxu0
        %v264 = vpop.f32.mrb[0].mxu0
        %265 = vdwg.mxu0
        %v266 = vadd.f32 %v208, %v261
        %v267 = vxor.u32 %v266, 2147483648
        %v268 = vmul.f32 %v267, 1.442695
        %v269 = vpow.pop %v268
        %v270 = vadd.f32 %v269, 1.0
        %v271 = vrcp.pop %v270
        %v272 = vmul.f32 1.0, %v271
        %v273 = vtanh.pop %v266
        %275 = vrot.lane.b32.xlu0 %v207, 32
        %v276 = vpop.permute.xlu0 %275
        %v278 = vmul.f32 %v272, %v276
        %280 = vrot.lane.b32.xlu0 %v273, 64
        %v281 = vpop.permute.xlu0 %280
        %v283 = vmul.f32 %v272, %v281
        %285 = vrot.lane.b32.xlu0 %v283, 32
        %v286 = vpop.permute.xlu0 %285
        %v288 = vadd.f32 %v278, %v286
        %v289 = vtanh.pop %v288
        %291 = vrot.lane.b32.xlu0 %v289, 64
        %v292 = vpop.permute.xlu0 %291
        %v294 = vmul.f32 %v272, %v292
        %v297 = vunpack.c.l.s4 1966171168
        %v298 = vunpack.c.0.s8 %v297
        %v299 = vlaneseq
        %v300 = vshrl.u32 %v299, 7
        %v301 = vsub.s32 %v298, %v300
        %v302 = vrot.slane %v294, %v301
        %v303 = vcombine.high %v302, %v302
        %v305 = vunpack.c.l.s4 1966171168
        %v306 = vunpack.c.0.s8 %v305
        %v307 = vlaneseq
        %v308 = vshrl.u32 %v307, 7
        %v309 = vsub.s32 %v306, %v308
        %v310 = vrot.slane %v302, %v309
        %v312 = vunpack.c.l.s4 1966171168
        %v313 = vunpack.c.0.s8 %v312
        %v314 = vlaneseq
        %v315 = vshrl.u32 %v314, 7
        %v316 = vsub.s32 %v313, %v315
        %v317 = vrot.slane %v303, %v316
        %v318 = vlaneseq
        %v319 = vshrl.u32 %v318, 7
        %v320 = vsub.s32 0, %v319
        %v321 = vrot.slane %v310, %v320
        %v322 = vlaneseq
        %v323 = vshrl.u32 %v322, 7
        %v324 = vsub.s32 0, %v323
        %v325 = vrot.slane %v317, %v324
        %326 = vrot.lane.b32.xlu0 %v321, 32
        %v327 = vpop.permute.xlu0 %326
        %328 = vrot.lane.b32.xlu0 %v325, 32
        %v329 = vpop.permute.xlu0 %328
        %vm332 = vcmask 253952
        %333 = vst.msk [vmem:[%s183] sm:$0x1] %vm332, %v327
        %334 = vst.msk [vmem:[%s183 + $0x8] sm:$0x1] %vm332, %v329
        %s335 = scalar_lea.vmem %s192, 2
        %v336 = vld [vmem:[%s335] sm:$0x3]
        %v337 = vpack.c.bf16 %v294, %v294
        %339 = vrot.lane.b32.xlu0 %v337, 32
        %v340 = vpop.permute.xlu0 %339
        %v342 = vsel %vm222, %v340, 0
        %344 = vmatprep.subr.bf16.mxu0 0
        %345 = vmatpush1.bf16.msra.mxu0 %v218
        %346 = vmatprep.subr.bf16.mxu0 0
        %347 = vmatpush1.bf16.msra.mxu0 %v219
        %348 = vmatprep.subr.bf16.mxu0 0
        %349 = vmatpush1.bf16.msra.mxu0 0
        %350 = vmatprep.subr.bf16.mxu0 0
        %351 = vmatpush1.bf16.msra.mxu0 0
        %352 = vmatprep.subr.bf16.mxu0 0
        %353 = vmatpush1.bf16.msra.mxu0 0
        %354 = vmatprep.subr.bf16.mxu0 0
        %355 = vmatpush1.bf16.msra.mxu0 0
        %356 = vmatprep.subr.bf16.mxu0 0
        %357 = vmatpush1.bf16.msra.mxu0 0
        %358 = vmatprep.subr.bf16.mxu0 0
        %359 = vmatpush1.bf16.msra.mxu0 0
        %360 = vmatprep.subr.bf16.mxu0 0
        %361 = vmatpush1.bf16.msra.mxu0 0
        %362 = vmatprep.subr.bf16.mxu0 0
        %363 = vmatpush1.bf16.msra.mxu0 0
        %364 = vmatprep.subr.bf16.mxu0 0
        %365 = vmatpush1.bf16.msra.mxu0 0
        %366 = vmatprep.subr.bf16.mxu0 0
        %367 = vmatpush1.bf16.msra.mxu0 0
        %368 = vmatprep.subr.bf16.mxu0 0
        %369 = vmatpush1.bf16.msra.mxu0 0
        %370 = vmatprep.subr.bf16.mxu0 0
        %371 = vmatpush1.bf16.msra.mxu0 0
        %372 = vmatprep.subr.bf16.mxu0 0
        %373 = vmatpush1.bf16.msra.mxu0 0
        %374 = vmatprep.subr.bf16.mxu0 0
        %375 = vmatpush1.bf16.msra.mxu0 0
        %376 = vmatprep.mubr.bf16.mxu0 0
        %377 = vmatmul.mubr.bf16.gmra.mrb[0].mxu0 %v342
        %v378 = vpop.f32.mrb[0].mxu0
        %v379 = vadd.f32 0.0, %v378
        %v380 = vpop.f32.mrb[0].mxu0
        %v381 = vpop.f32.mrb[0].mxu0
        %v382 = vpop.f32.mrb[0].mxu0
        %383 = vdwg.mxu0
        %v384 = vadd.f32 %v336, %v379
        %v385 = vxor.u32 %v384, 2147483648
        %v386 = vmul.f32 %v385, 1.442695
        %v387 = vpow.pop %v386
        %v388 = vadd.f32 %v387, 1.0
        %v389 = vrcp.pop %v388
        %v390 = vmul.f32 1.0, %v389
        %v391 = vtanh.pop %v384
        %v392 = vmul.f32 %v390, %v288
        %394 = vrot.lane.b32.xlu0 %v391, 64
        %v395 = vpop.permute.xlu0 %394
        %v397 = vmul.f32 %v390, %v395
        %399 = vrot.lane.b32.xlu0 %v397, 32
        %v400 = vpop.permute.xlu0 %399
        %v402 = vadd.f32 %v392, %v400
        %v403 = vtanh.pop %v402
        %405 = vrot.lane.b32.xlu0 %v403, 64
        %v406 = vpop.permute.xlu0 %405
        %v408 = vmul.f32 %v390, %v406
        %v411 = vunpack.c.l.s4 1966171168
        %v412 = vunpack.c.0.s8 %v411
        %v413 = vlaneseq
        %v414 = vshrl.u32 %v413, 7
        %v415 = vsub.s32 %v412, %v414
        %v416 = vrot.slane %v408, %v415
        %v417 = vcombine.high %v416, %v416
        %v419 = vunpack.c.l.s4 1966171168
        %v420 = vunpack.c.0.s8 %v419
        %v421 = vlaneseq
        %v422 = vshrl.u32 %v421, 7
        %v423 = vsub.s32 %v420, %v422
        %v424 = vrot.slane %v416, %v423
        %v426 = vunpack.c.l.s4 1966171168
        %v427 = vunpack.c.0.s8 %v426
        %v428 = vlaneseq
        %v429 = vshrl.u32 %v428, 7
        %v430 = vsub.s32 %v427, %v429
        %v431 = vrot.slane %v417, %v430
        %v432 = vlaneseq
        %v433 = vshrl.u32 %v432, 7
        %v434 = vsub.s32 0, %v433
        %v435 = vrot.slane %v424, %v434
        %v436 = vlaneseq
        %v437 = vshrl.u32 %v436, 7
        %v438 = vsub.s32 0, %v437
        %v439 = vrot.slane %v431, %v438
        %440 = vrot.lane.b32.xlu0 %v435, 32
        %v441 = vpop.permute.xlu0 %440
        %442 = vrot.lane.b32.xlu0 %v439, 32
        %v443 = vpop.permute.xlu0 %442
        %446 = vst.msk [vmem:[%s183 + $0x1] sm:$0x1] %vm332, %v441
        %447 = vst.msk [vmem:[%s183 + $0x9] sm:$0x1] %vm332, %v443
        %s448 = scalar_lea.vmem %s192, 4
        %v449 = vld [vmem:[%s448] sm:$0x3]
        %v450 = vpack.c.bf16 %v408, %v408
        %452 = vrot.lane.b32.xlu0 %v450, 32
        %v453 = vpop.permute.xlu0 %452
        %v455 = vsel %vm222, %v453, 0
        %457 = vmatprep.subr.bf16.mxu0 0
        %458 = vmatpush1.bf16.msra.mxu0 %v218
        %459 = vmatprep.subr.bf16.mxu0 0
        %460 = vmatpush1.bf16.msra.mxu0 %v219
        %461 = vmatprep.subr.bf16.mxu0 0
        %462 = vmatpush1.bf16.msra.mxu0 0
        %463 = vmatprep.subr.bf16.mxu0 0
        %464 = vmatpush1.bf16.msra.mxu0 0
        %465 = vmatprep.subr.bf16.mxu0 0
        %466 = vmatpush1.bf16.msra.mxu0 0
        %467 = vmatprep.subr.bf16.mxu0 0
        %468 = vmatpush1.bf16.msra.mxu0 0
        %469 = vmatprep.subr.bf16.mxu0 0
        %470 = vmatpush1.bf16.msra.mxu0 0
        %471 = vmatprep.subr.bf16.mxu0 0
        %472 = vmatpush1.bf16.msra.mxu0 0
        %473 = vmatprep.subr.bf16.mxu0 0
        %474 = vmatpush1.bf16.msra.mxu0 0
        %475 = vmatprep.subr.bf16.mxu0 0
        %476 = vmatpush1.bf16.msra.mxu0 0
        %477 = vmatprep.subr.bf16.mxu0 0
        %478 = vmatpush1.bf16.msra.mxu0 0
        %479 = vmatprep.subr.bf16.mxu0 0
        %480 = vmatpush1.bf16.msra.mxu0 0
        %481 = vmatprep.subr.bf16.mxu0 0
        %482 = vmatpush1.bf16.msra.mxu0 0
        %483 = vmatprep.subr.bf16.mxu0 0
        %484 = vmatpush1.bf16.msra.mxu0 0
        %485 = vmatprep.subr.bf16.mxu0 0
        %486 = vmatpush1.bf16.msra.mxu0 0
        %487 = vmatprep.subr.bf16.mxu0 0
        %488 = vmatpush1.bf16.msra.mxu0 0
        %489 = vmatprep.mubr.bf16.mxu0 0
        %490 = vmatmul.mubr.bf16.gmra.mrb[0].mxu0 %v455
        %v491 = vpop.f32.mrb[0].mxu0
        %v492 = vadd.f32 0.0, %v491
        %v493 = vpop.f32.mrb[0].mxu0
        %v494 = vpop.f32.mrb[0].mxu0
        %v495 = vpop.f32.mrb[0].mxu0
        %496 = vdwg.mxu0
        %v497 = vadd.f32 %v449, %v492
        %v498 = vxor.u32 %v497, 2147483648
        %v499 = vmul.f32 %v498, 1.442695
        %v500 = vpow.pop %v499
        %v501 = vadd.f32 %v500, 1.0
        %v502 = vrcp.pop %v501
        %v503 = vmul.f32 1.0, %v502
        %v504 = vtanh.pop %v497
        %v505 = vmul.f32 %v503, %v402
        %507 = vrot.lane.b32.xlu0 %v504, 64
        %v508 = vpop.permute.xlu0 %507
        %v510 = vmul.f32 %v503, %v508
        %512 = vrot.lane.b32.xlu0 %v510, 32
        %v513 = vpop.permute.xlu0 %512
        %v515 = vadd.f32 %v505, %v513
        %v516 = vtanh.pop %v515
        %518 = vrot.lane.b32.xlu0 %v516, 64
        %v519 = vpop.permute.xlu0 %518
        %v521 = vmul.f32 %v503, %v519
        %v524 = vunpack.c.l.s4 1966171168
        %v525 = vunpack.c.0.s8 %v524
        %v526 = vlaneseq
        %v527 = vshrl.u32 %v526, 7
        %v528 = vsub.s32 %v525, %v527
        %v529 = vrot.slane %v521, %v528
        %v530 = vcombine.high %v529, %v529
        %v532 = vunpack.c.l.s4 1966171168
        %v533 = vunpack.c.0.s8 %v532
        %v534 = vlaneseq
        %v535 = vshrl.u32 %v534, 7
        %v536 = vsub.s32 %v533, %v535
        %v537 = vrot.slane %v529, %v536
        %v539 = vunpack.c.l.s4 1966171168
        %v540 = vunpack.c.0.s8 %v539
        %v541 = vlaneseq
        %v542 = vshrl.u32 %v541, 7
        %v543 = vsub.s32 %v540, %v542
        %v544 = vrot.slane %v530, %v543
        %v545 = vlaneseq
        %v546 = vshrl.u32 %v545, 7
        %v547 = vsub.s32 0, %v546
        %v548 = vrot.slane %v537, %v547
        %v549 = vlaneseq
        %v550 = vshrl.u32 %v549, 7
        %v551 = vsub.s32 0, %v550
        %v552 = vrot.slane %v544, %v551
        %553 = vrot.lane.b32.xlu0 %v548, 32
        %v554 = vpop.permute.xlu0 %553
        %555 = vrot.lane.b32.xlu0 %v552, 32
        %v556 = vpop.permute.xlu0 %555
        %559 = vst.msk [vmem:[%s183 + $0x2] sm:$0x1] %vm332, %v554
        %560 = vst.msk [vmem:[%s183 + $0xa] sm:$0x1] %vm332, %v556
        %s561 = scalar_lea.vmem %s192, 6
        %v562 = vld [vmem:[%s561] sm:$0x3]
        %v563 = vpack.c.bf16 %v521, %v521
        %565 = vrot.lane.b32.xlu0 %v563, 32
        %v566 = vpop.permute.xlu0 %565
        %v568 = vsel %vm222, %v566, 0
        %570 = vmatprep.subr.bf16.mxu0 0
        %571 = vmatpush1.bf16.msra.mxu0 %v218
        %572 = vmatprep.subr.bf16.mxu0 0
        %573 = vmatpush1.bf16.msra.mxu0 %v219
        %574 = vmatprep.subr.bf16.mxu0 0
        %575 = vmatpush1.bf16.msra.mxu0 0
        %576 = vmatprep.subr.bf16.mxu0 0
        %577 = vmatpush1.bf16.msra.mxu0 0
        %578 = vmatprep.subr.bf16.mxu0 0
        %579 = vmatpush1.bf16.msra.mxu0 0
        %580 = vmatprep.subr.bf16.mxu0 0
        %581 = vmatpush1.bf16.msra.mxu0 0
        %582 = vmatprep.subr.bf16.mxu0 0
        %583 = vmatpush1.bf16.msra.mxu0 0
        %584 = vmatprep.subr.bf16.mxu0 0
        %585 = vmatpush1.bf16.msra.mxu0 0
        %586 = vmatprep.subr.bf16.mxu0 0
        %587 = vmatpush1.bf16.msra.mxu0 0
        %588 = vmatprep.subr.bf16.mxu0 0
        %589 = vmatpush1.bf16.msra.mxu0 0
        %590 = vmatprep.subr.bf16.mxu0 0
        %591 = vmatpush1.bf16.msra.mxu0 0
        %592 = vmatprep.subr.bf16.mxu0 0
        %593 = vmatpush1.bf16.msra.mxu0 0
        %594 = vmatprep.subr.bf16.mxu0 0
        %595 = vmatpush1.bf16.msra.mxu0 0
        %596 = vmatprep.subr.bf16.mxu0 0
        %597 = vmatpush1.bf16.msra.mxu0 0
        %598 = vmatprep.subr.bf16.mxu0 0
        %599 = vmatpush1.bf16.msra.mxu0 0
        %600 = vmatprep.subr.bf16.mxu0 0
        %601 = vmatpush1.bf16.msra.mxu0 0
        %602 = vmatprep.mubr.bf16.mxu0 0
        %603 = vmatmul.mubr.bf16.gmra.mrb[0].mxu0 %v568
        %v604 = vpop.f32.mrb[0].mxu0
        %v605 = vadd.f32 0.0, %v604
        %v606 = vpop.f32.mrb[0].mxu0
        %v607 = vpop.f32.mrb[0].mxu0
        %v608 = vpop.f32.mrb[0].mxu0
        %609 = vdwg.mxu0
        %v610 = vadd.f32 %v562, %v605
        %v611 = vxor.u32 %v610, 2147483648
        %v612 = vmul.f32 %v611, 1.442695
        %v613 = vpow.pop %v612
        %v614 = vadd.f32 %v613, 1.0
        %v615 = vrcp.pop %v614
        %v616 = vmul.f32 1.0, %v615
        %v617 = vtanh.pop %v610
        %v618 = vmul.f32 %v616, %v515
        %620 = vrot.lane.b32.xlu0 %v617, 64
        %v621 = vpop.permute.xlu0 %620
        %v623 = vmul.f32 %v616, %v621
        %625 = vrot.lane.b32.xlu0 %v623, 32
        %v626 = vpop.permute.xlu0 %625
        %v628 = vadd.f32 %v618, %v626
        %v629 = vtanh.pop %v628
        %631 = vrot.lane.b32.xlu0 %v629, 64
        %v632 = vpop.permute.xlu0 %631
        %v634 = vmul.f32 %v616, %v632
        %v637 = vunpack.c.l.s4 1966171168
        %v638 = vunpack.c.0.s8 %v637
        %v639 = vlaneseq
        %v640 = vshrl.u32 %v639, 7
        %v641 = vsub.s32 %v638, %v640
        %v642 = vrot.slane %v634, %v641
        %v643 = vcombine.high %v642, %v642
        %v645 = vunpack.c.l.s4 1966171168
        %v646 = vunpack.c.0.s8 %v645
        %v647 = vlaneseq
        %v648 = vshrl.u32 %v647, 7
        %v649 = vsub.s32 %v646, %v648
        %v650 = vrot.slane %v642, %v649
        %v652 = vunpack.c.l.s4 1966171168
        %v653 = vunpack.c.0.s8 %v652
        %v654 = vlaneseq
        %v655 = vshrl.u32 %v654, 7
        %v656 = vsub.s32 %v653, %v655
        %v657 = vrot.slane %v643, %v656
        %v658 = vlaneseq
        %v659 = vshrl.u32 %v658, 7
        %v660 = vsub.s32 0, %v659
        %v661 = vrot.slane %v650, %v660
        %v662 = vlaneseq
        %v663 = vshrl.u32 %v662, 7
        %v664 = vsub.s32 0, %v663
        %v665 = vrot.slane %v657, %v664
        %666 = vrot.lane.b32.xlu0 %v661, 32
        %v667 = vpop.permute.xlu0 %666
        %668 = vrot.lane.b32.xlu0 %v665, 32
        %v669 = vpop.permute.xlu0 %668
        %672 = vst.msk [vmem:[%s183 + $0x3] sm:$0x1] %vm332, %v667
        %673 = vst.msk [vmem:[%s183 + $0xb] sm:$0x1] %vm332, %v669
        %s674 = scalar_lea.vmem %s192, 8
        %v675 = vld [vmem:[%s674] sm:$0x3]
        %v676 = vpack.c.bf16 %v634, %v634
        %678 = vrot.lane.b32.xlu0 %v676, 32
        %v679 = vpop.permute.xlu0 %678
        %v681 = vsel %vm222, %v679, 0
        %683 = vmatprep.subr.bf16.mxu0 0
        %684 = vmatpush1.bf16.msra.mxu0 %v218
        %685 = vmatprep.subr.bf16.mxu0 0
        %686 = vmatpush1.bf16.msra.mxu0 %v219
        %687 = vmatprep.subr.bf16.mxu0 0
        %688 = vmatpush1.bf16.msra.mxu0 0
        %689 = vmatprep.subr.bf16.mxu0 0
        %690 = vmatpush1.bf16.msra.mxu0 0
        %691 = vmatprep.subr.bf16.mxu0 0
        %692 = vmatpush1.bf16.msra.mxu0 0
        %693 = vmatprep.subr.bf16.mxu0 0
        %694 = vmatpush1.bf16.msra.mxu0 0
        %695 = vmatprep.subr.bf16.mxu0 0
        %696 = vmatpush1.bf16.msra.mxu0 0
        %697 = vmatprep.subr.bf16.mxu0 0
        %698 = vmatpush1.bf16.msra.mxu0 0
        %699 = vmatprep.subr.bf16.mxu0 0
        %700 = vmatpush1.bf16.msra.mxu0 0
        %701 = vmatprep.subr.bf16.mxu0 0
        %702 = vmatpush1.bf16.msra.mxu0 0
        %703 = vmatprep.subr.bf16.mxu0 0
        %704 = vmatpush1.bf16.msra.mxu0 0
        %705 = vmatprep.subr.bf16.mxu0 0
        %706 = vmatpush1.bf16.msra.mxu0 0
        %707 = vmatprep.subr.bf16.mxu0 0
        %708 = vmatpush1.bf16.msra.mxu0 0
        %709 = vmatprep.subr.bf16.mxu0 0
        %710 = vmatpush1.bf16.msra.mxu0 0
        %711 = vmatprep.subr.bf16.mxu0 0
        %712 = vmatpush1.bf16.msra.mxu0 0
        %713 = vmatprep.subr.bf16.mxu0 0
        %714 = vmatpush1.bf16.msra.mxu0 0
        %715 = vmatprep.mubr.bf16.mxu0 0
        %716 = vmatmul.mubr.bf16.gmra.mrb[0].mxu0 %v681
        %v717 = vpop.f32.mrb[0].mxu0
        %v718 = vadd.f32 0.0, %v717
        %v719 = vpop.f32.mrb[0].mxu0
        %v720 = vpop.f32.mrb[0].mxu0
        %v721 = vpop.f32.mrb[0].mxu0
        %722 = vdwg.mxu0
        %v723 = vadd.f32 %v675, %v718
        %v724 = vxor.u32 %v723, 2147483648
        %v725 = vmul.f32 %v724, 1.442695
        %v726 = vpow.pop %v725
        %v727 = vadd.f32 %v726, 1.0
        %v728 = vrcp.pop %v727
        %v729 = vmul.f32 1.0, %v728
        %v730 = vtanh.pop %v723
        %v731 = vmul.f32 %v729, %v628
        %733 = vrot.lane.b32.xlu0 %v730, 64
        %v734 = vpop.permute.xlu0 %733
        %v736 = vmul.f32 %v729, %v734
        %738 = vrot.lane.b32.xlu0 %v736, 32
        %v739 = vpop.permute.xlu0 %738
        %v741 = vadd.f32 %v731, %v739
        %v742 = vtanh.pop %v741
        %744 = vrot.lane.b32.xlu0 %v742, 64
        %v745 = vpop.permute.xlu0 %744
        %v747 = vmul.f32 %v729, %v745
        %v750 = vunpack.c.l.s4 1966171168
        %v751 = vunpack.c.0.s8 %v750
        %v752 = vlaneseq
        %v753 = vshrl.u32 %v752, 7
        %v754 = vsub.s32 %v751, %v753
        %v755 = vrot.slane %v747, %v754
        %v756 = vcombine.high %v755, %v755
        %v758 = vunpack.c.l.s4 1966171168
        %v759 = vunpack.c.0.s8 %v758
        %v760 = vlaneseq
        %v761 = vshrl.u32 %v760, 7
        %v762 = vsub.s32 %v759, %v761
        %v763 = vrot.slane %v755, %v762
        %v765 = vunpack.c.l.s4 1966171168
        %v766 = vunpack.c.0.s8 %v765
        %v767 = vlaneseq
        %v768 = vshrl.u32 %v767, 7
        %v769 = vsub.s32 %v766, %v768
        %v770 = vrot.slane %v756, %v769
        %v771 = vlaneseq
        %v772 = vshrl.u32 %v771, 7
        %v773 = vsub.s32 0, %v772
        %v774 = vrot.slane %v763, %v773
        %v775 = vlaneseq
        %v776 = vshrl.u32 %v775, 7
        %v777 = vsub.s32 0, %v776
        %v778 = vrot.slane %v770, %v777
        %779 = vrot.lane.b32.xlu0 %v774, 32
        %v780 = vpop.permute.xlu0 %779
        %781 = vrot.lane.b32.xlu0 %v778, 32
        %v782 = vpop.permute.xlu0 %781
        %785 = vst.msk [vmem:[%s183 + $0x4] sm:$0x1] %vm332, %v780
        %786 = vst.msk [vmem:[%s183 + $0xc] sm:$0x1] %vm332, %v782
        %s787 = scalar_lea.vmem %s192, 10
        %v788 = vld [vmem:[%s787] sm:$0x3]
        %v789 = vpack.c.bf16 %v747, %v747
        %791 = vrot.lane.b32.xlu0 %v789, 32
        %v792 = vpop.permute.xlu0 %791
        %v794 = vsel %vm222, %v792, 0
        %796 = vmatprep.subr.bf16.mxu0 0
        %797 = vmatpush1.bf16.msra.mxu0 %v218
        %798 = vmatprep.subr.bf16.mxu0 0
        %799 = vmatpush1.bf16.msra.mxu0 %v219
        %800 = vmatprep.subr.bf16.mxu0 0
        %801 = vmatpush1.bf16.msra.mxu0 0
        %802 = vmatprep.subr.bf16.mxu0 0
        %803 = vmatpush1.bf16.msra.mxu0 0
        %804 = vmatprep.subr.bf16.mxu0 0
        %805 = vmatpush1.bf16.msra.mxu0 0
        %806 = vmatprep.subr.bf16.mxu0 0
        %807 = vmatpush1.bf16.msra.mxu0 0
        %808 = vmatprep.subr.bf16.mxu0 0
        %809 = vmatpush1.bf16.msra.mxu0 0
        %810 = vmatprep.subr.bf16.mxu0 0
        %811 = vmatpush1.bf16.msra.mxu0 0
        %812 = vmatprep.subr.bf16.mxu0 0
        %813 = vmatpush1.bf16.msra.mxu0 0
        %814 = vmatprep.subr.bf16.mxu0 0
        %815 = vmatpush1.bf16.msra.mxu0 0
        %816 = vmatprep.subr.bf16.mxu0 0
        %817 = vmatpush1.bf16.msra.mxu0 0
        %818 = vmatprep.subr.bf16.mxu0 0
        %819 = vmatpush1.bf16.msra.mxu0 0
        %820 = vmatprep.subr.bf16.mxu0 0
        %821 = vmatpush1.bf16.msra.mxu0 0
        %822 = vmatprep.subr.bf16.mxu0 0
        %823 = vmatpush1.bf16.msra.mxu0 0
        %824 = vmatprep.subr.bf16.mxu0 0
        %825 = vmatpush1.bf16.msra.mxu0 0
        %826 = vmatprep.subr.bf16.mxu0 0
        %827 = vmatpush1.bf16.msra.mxu0 0
        %828 = vmatprep.mubr.bf16.mxu0 0
        %829 = vmatmul.mubr.bf16.gmra.mrb[0].mxu0 %v794
        %v830 = vpop.f32.mrb[0].mxu0
        %v831 = vadd.f32 0.0, %v830
        %v832 = vpop.f32.mrb[0].mxu0
        %v833 = vpop.f32.mrb[0].mxu0
        %v834 = vpop.f32.mrb[0].mxu0
        %835 = vdwg.mxu0
        %v836 = vadd.f32 %v788, %v831
        %v837 = vxor.u32 %v836, 2147483648
        %v838 = vmul.f32 %v837, 1.442695
        %v839 = vpow.pop %v838
        %v840 = vadd.f32 %v839, 1.0
        %v841 = vrcp.pop %v840
        %v842 = vmul.f32 1.0, %v841
        %v843 = vtanh.pop %v836
        %v844 = vmul.f32 %v842, %v741
        %846 = vrot.lane.b32.xlu0 %v843, 64
        %v847 = vpop.permute.xlu0 %846
        %v849 = vmul.f32 %v842, %v847
        %851 = vrot.lane.b32.xlu0 %v849, 32
        %v852 = vpop.permute.xlu0 %851
        %v854 = vadd.f32 %v844, %v852
        %v855 = vtanh.pop %v854
        %857 = vrot.lane.b32.xlu0 %v855, 64
        %v858 = vpop.permute.xlu0 %857
        %v860 = vmul.f32 %v842, %v858
        %v863 = vunpack.c.l.s4 1966171168
        %v864 = vunpack.c.0.s8 %v863
        %v865 = vlaneseq
        %v866 = vshrl.u32 %v865, 7
        %v867 = vsub.s32 %v864, %v866
        %v868 = vrot.slane %v860, %v867
        %v869 = vcombine.high %v868, %v868
        %v871 = vunpack.c.l.s4 1966171168
        %v872 = vunpack.c.0.s8 %v871
        %v873 = vlaneseq
        %v874 = vshrl.u32 %v873, 7
        %v875 = vsub.s32 %v872, %v874
        %v876 = vrot.slane %v868, %v875
        %v878 = vunpack.c.l.s4 1966171168
        %v879 = vunpack.c.0.s8 %v878
        %v880 = vlaneseq
        %v881 = vshrl.u32 %v880, 7
        %v882 = vsub.s32 %v879, %v881
        %v883 = vrot.slane %v869, %v882
        %v884 = vlaneseq
        %v885 = vshrl.u32 %v884, 7
        %v886 = vsub.s32 0, %v885
        %v887 = vrot.slane %v876, %v886
        %v888 = vlaneseq
        %v889 = vshrl.u32 %v888, 7
        %v890 = vsub.s32 0, %v889
        %v891 = vrot.slane %v883, %v890
        %892 = vrot.lane.b32.xlu0 %v887, 32
        %v893 = vpop.permute.xlu0 %892
        %894 = vrot.lane.b32.xlu0 %v891, 32
        %v895 = vpop.permute.xlu0 %894
        %898 = vst.msk [vmem:[%s183 + $0x5] sm:$0x1] %vm332, %v893
        %899 = vst.msk [vmem:[%s183 + $0xd] sm:$0x1] %vm332, %v895
        %s900 = scalar_lea.vmem %s192, 12
        %v901 = vld [vmem:[%s900] sm:$0x3]
        %v902 = vpack.c.bf16 %v860, %v860
        %904 = vrot.lane.b32.xlu0 %v902, 32
        %v905 = vpop.permute.xlu0 %904
        %v907 = vsel %vm222, %v905, 0
        %909 = vmatprep.subr.bf16.mxu0 0
        %910 = vmatpush1.bf16.msra.mxu0 %v218
        %911 = vmatprep.subr.bf16.mxu0 0
        %912 = vmatpush1.bf16.msra.mxu0 %v219
        %913 = vmatprep.subr.bf16.mxu0 0
        %914 = vmatpush1.bf16.msra.mxu0 0
        %915 = vmatprep.subr.bf16.mxu0 0
        %916 = vmatpush1.bf16.msra.mxu0 0
        %917 = vmatprep.subr.bf16.mxu0 0
        %918 = vmatpush1.bf16.msra.mxu0 0
        %919 = vmatprep.subr.bf16.mxu0 0
        %920 = vmatpush1.bf16.msra.mxu0 0
        %921 = vmatprep.subr.bf16.mxu0 0
        %922 = vmatpush1.bf16.msra.mxu0 0
        %923 = vmatprep.subr.bf16.mxu0 0
        %924 = vmatpush1.bf16.msra.mxu0 0
        %925 = vmatprep.subr.bf16.mxu0 0
        %926 = vmatpush1.bf16.msra.mxu0 0
        %927 = vmatprep.subr.bf16.mxu0 0
        %928 = vmatpush1.bf16.msra.mxu0 0
        %929 = vmatprep.subr.bf16.mxu0 0
        %930 = vmatpush1.bf16.msra.mxu0 0
        %931 = vmatprep.subr.bf16.mxu0 0
        %932 = vmatpush1.bf16.msra.mxu0 0
        %933 = vmatprep.subr.bf16.mxu0 0
        %934 = vmatpush1.bf16.msra.mxu0 0
        %935 = vmatprep.subr.bf16.mxu0 0
        %936 = vmatpush1.bf16.msra.mxu0 0
        %937 = vmatprep.subr.bf16.mxu0 0
        %938 = vmatpush1.bf16.msra.mxu0 0
        %939 = vmatprep.subr.bf16.mxu0 0
        %940 = vmatpush1.bf16.msra.mxu0 0
        %941 = vmatprep.mubr.bf16.mxu0 0
        %942 = vmatmul.mubr.bf16.gmra.mrb[0].mxu0 %v907
        %v943 = vpop.f32.mrb[0].mxu0
        %v944 = vadd.f32 0.0, %v943
        %v945 = vpop.f32.mrb[0].mxu0
        %v946 = vpop.f32.mrb[0].mxu0
        %v947 = vpop.f32.mrb[0].mxu0
        %948 = vdwg.mxu0
        %v949 = vadd.f32 %v901, %v944
        %v950 = vxor.u32 %v949, 2147483648
        %v951 = vmul.f32 %v950, 1.442695
        %v952 = vpow.pop %v951
        %v953 = vadd.f32 %v952, 1.0
        %v954 = vrcp.pop %v953
        %v955 = vmul.f32 1.0, %v954
        %v956 = vtanh.pop %v949
        %v957 = vmul.f32 %v955, %v854
        %959 = vrot.lane.b32.xlu0 %v956, 64
        %v960 = vpop.permute.xlu0 %959
        %v962 = vmul.f32 %v955, %v960
        %964 = vrot.lane.b32.xlu0 %v962, 32
        %v965 = vpop.permute.xlu0 %964
        %v967 = vadd.f32 %v957, %v965
        %v968 = vtanh.pop %v967
        %970 = vrot.lane.b32.xlu0 %v968, 64
        %v971 = vpop.permute.xlu0 %970
        %v973 = vmul.f32 %v955, %v971
        %v976 = vunpack.c.l.s4 1966171168
        %v977 = vunpack.c.0.s8 %v976
        %v978 = vlaneseq
        %v979 = vshrl.u32 %v978, 7
        %v980 = vsub.s32 %v977, %v979
        %v981 = vrot.slane %v973, %v980
        %v982 = vcombine.high %v981, %v981
        %v984 = vunpack.c.l.s4 1966171168
        %v985 = vunpack.c.0.s8 %v984
        %v986 = vlaneseq
        %v987 = vshrl.u32 %v986, 7
        %v988 = vsub.s32 %v985, %v987
        %v989 = vrot.slane %v981, %v988
        %v991 = vunpack.c.l.s4 1966171168
        %v992 = vunpack.c.0.s8 %v991
        %v993 = vlaneseq
        %v994 = vshrl.u32 %v993, 7
        %v995 = vsub.s32 %v992, %v994
        %v996 = vrot.slane %v982, %v995
        %v997 = vlaneseq
        %v998 = vshrl.u32 %v997, 7
        %v999 = vsub.s32 0, %v998
        %v1000 = vrot.slane %v989, %v999
        %v1001 = vlaneseq
        %v1002 = vshrl.u32 %v1001, 7
        %v1003 = vsub.s32 0, %v1002
        %v1004 = vrot.slane %v996, %v1003
        %1005 = vrot.lane.b32.xlu0 %v1000, 32
        %v1006 = vpop.permute.xlu0 %1005
        %1007 = vrot.lane.b32.xlu0 %v1004, 32
        %v1008 = vpop.permute.xlu0 %1007
        %1011 = vst.msk [vmem:[%s183 + $0x6] sm:$0x1] %vm332, %v1006
        %1012 = vst.msk [vmem:[%s183 + $0xe] sm:$0x1] %vm332, %v1008
        %s1013 = scalar_lea.vmem %s192, 14
        %v1014 = vld [vmem:[%s1013] sm:$0x3]
        %v1015 = vpack.c.bf16 %v973, %v973
        %1017 = vrot.lane.b32.xlu0 %v1015, 32
        %v1018 = vpop.permute.xlu0 %1017
        %v1020 = vsel %vm222, %v1018, 0
        %1022 = vmatprep.subr.bf16.mxu0 0
        %1023 = vmatpush1.bf16.msra.mxu0 %v218
        %1024 = vmatprep.subr.bf16.mxu0 0
        %1025 = vmatpush1.bf16.msra.mxu0 %v219
        %1026 = vmatprep.subr.bf16.mxu0 0
        %1027 = vmatpush1.bf16.msra.mxu0 0
        %1028 = vmatprep.subr.bf16.mxu0 0
        %1029 = vmatpush1.bf16.msra.mxu0 0
        %1030 = vmatprep.subr.bf16.mxu0 0
        %1031 = vmatpush1.bf16.msra.mxu0 0
        %1032 = vmatprep.subr.bf16.mxu0 0
        %1033 = vmatpush1.bf16.msra.mxu0 0
        %1034 = vmatprep.subr.bf16.mxu0 0
        %1035 = vmatpush1.bf16.msra.mxu0 0
        %1036 = vmatprep.subr.bf16.mxu0 0
        %1037 = vmatpush1.bf16.msra.mxu0 0
        %1038 = vmatprep.subr.bf16.mxu0 0
        %1039 = vmatpush1.bf16.msra.mxu0 0
        %1040 = vmatprep.subr.bf16.mxu0 0
        %1041 = vmatpush1.bf16.msra.mxu0 0
        %1042 = vmatprep.subr.bf16.mxu0 0
        %1043 = vmatpush1.bf16.msra.mxu0 0
        %1044 = vmatprep.subr.bf16.mxu0 0
        %1045 = vmatpush1.bf16.msra.mxu0 0
        %1046 = vmatprep.subr.bf16.mxu0 0
        %1047 = vmatpush1.bf16.msra.mxu0 0
        %1048 = vmatprep.subr.bf16.mxu0 0
        %1049 = vmatpush1.bf16.msra.mxu0 0
        %1050 = vmatprep.subr.bf16.mxu0 0
        %1051 = vmatpush1.bf16.msra.mxu0 0
        %1052 = vmatprep.subr.bf16.mxu0 0
        %1053 = vmatpush1.bf16.msra.mxu0 0
        %1054 = vmatprep.mubr.bf16.mxu0 0
        %1055 = vmatmul.mubr.bf16.gmra.mrb[0].mxu0 %v1020
        %v1056 = vpop.f32.mrb[0].mxu0
        %v1057 = vadd.f32 0.0, %v1056
        %v1058 = vpop.f32.mrb[0].mxu0
        %v1059 = vpop.f32.mrb[0].mxu0
        %v1060 = vpop.f32.mrb[0].mxu0
        %1061 = vdwg.mxu0
        %v1062 = vadd.f32 %v1014, %v1057
        %v1063 = vxor.u32 %v1062, 2147483648
        %v1064 = vmul.f32 %v1063, 1.442695
        %v1065 = vpow.pop %v1064
        %v1066 = vadd.f32 %v1065, 1.0
        %v1067 = vrcp.pop %v1066
        %v1068 = vmul.f32 1.0, %v1067
        %v1069 = vtanh.pop %v1062
        %v1070 = vmul.f32 %v1068, %v967
        %1072 = vrot.lane.b32.xlu0 %v1069, 64
        %v1073 = vpop.permute.xlu0 %1072
        %v1075 = vmul.f32 %v1068, %v1073
        %1077 = vrot.lane.b32.xlu0 %v1075, 32
        %v1078 = vpop.permute.xlu0 %1077
        %v1080 = vadd.f32 %v1070, %v1078
        %v1081 = vtanh.pop %v1080
        %1083 = vrot.lane.b32.xlu0 %v1081, 64
        %v1084 = vpop.permute.xlu0 %1083
        %v1086 = vmul.f32 %v1068, %v1084
        %v1089 = vunpack.c.l.s4 1966171168
        %v1090 = vunpack.c.0.s8 %v1089
        %v1091 = vlaneseq
        %v1092 = vshrl.u32 %v1091, 7
        %v1093 = vsub.s32 %v1090, %v1092
        %v1094 = vrot.slane %v1086, %v1093
        %v1095 = vcombine.high %v1094, %v1094
        %v1097 = vunpack.c.l.s4 1966171168
        %v1098 = vunpack.c.0.s8 %v1097
        %v1099 = vlaneseq
        %v1100 = vshrl.u32 %v1099, 7
        %v1101 = vsub.s32 %v1098, %v1100
        %v1102 = vrot.slane %v1094, %v1101
        %v1104 = vunpack.c.l.s4 1966171168
        %v1105 = vunpack.c.0.s8 %v1104
        %v1106 = vlaneseq
        %v1107 = vshrl.u32 %v1106, 7
        %v1108 = vsub.s32 %v1105, %v1107
        %v1109 = vrot.slane %v1095, %v1108
        %v1110 = vlaneseq
        %v1111 = vshrl.u32 %v1110, 7
        %v1112 = vsub.s32 0, %v1111
        %v1113 = vrot.slane %v1102, %v1112
        %v1114 = vlaneseq
        %v1115 = vshrl.u32 %v1114, 7
        %v1116 = vsub.s32 0, %v1115
        %v1117 = vrot.slane %v1109, %v1116
        %1118 = vrot.lane.b32.xlu0 %v1113, 32
        %v1119 = vpop.permute.xlu0 %1118
        %1120 = vrot.lane.b32.xlu0 %v1117, 32
        %v1121 = vpop.permute.xlu0 %1120
        %1124 = vst.msk [vmem:[%s183 + $0x7] sm:$0x1] %vm332, %v1119
        %1125 = vst.msk [vmem:[%s183 + $0xf] sm:$0x1] %vm332, %v1121
        %1126 = vrot.lane.b32.xlu0 %v1086, 32
        %v1127 = vpop.permute.xlu0 %1126
        %vm1129 = vcmask 254976
        %1130 = vst.msk [vmem:[#allocation4] sm:$0x3] %vm1129, %v1127
        %1132 = vrot.lane.b32.xlu0 %v1080, 96
        %v1133 = vpop.permute.xlu0 %1132
        %1135 = vst.msk [vmem:[#allocation6] sm:$0x3] %vm1129, %v1133
        %s1136 = sand.u32 %s75, 1
        %s1137 = scalar_lea.sflag [#allocation3], %s1136
        %s1138 = sand.u32 %s75, 1
        %s1139 = smul.addr %s1138, 16
        %s1140 = scalar_lea.vmem [#allocation2], %s1139
        // Predicated region
        $region33: #{run.1} parent=27 // pred_check
          %p1141 = pneg %p85
        $region34: #{run.1} parent=27 // pred_check_branch
          %1143 = sbr.rel (%p1141) target = $region36
        $region35: #{run.1} parent=27 // pred_region
          %s1145 = ssub.s32 256, 256
          %1146 = vsyncadd %s1137, %s1145
          %s1147 = smul.addr %s20, 128
          %s1148 = scalar_lea.hbm %s2, %s1147
          %s1149 = sshll.u32 %s1140, 4
          %s1150 = int_to_ptr.vmem [resolvable:$true] %s1149
          %1155 = dma.vmem_to_hbm [thread:$0]  %s1150, 256, %s1148, %s1137, 128, 256, 8
        $region36: #{run.1} parent=27 // pred_fallthru
          _
        // Predicated region
        $region37: #{run.1} parent=27 // pred_check
          %p1156 = pneg %p106
        $region38: #{run.1} parent=27 // pred_check_branch
          %1158 = sbr.rel (%p1156) target = $region40
        $region39: #{run.1} parent=27 // pred_region
          %s1160 = ssub.s32 32, 32
          %1161 = vsyncadd [#allocation5], %s1160
          %s1163 = sshll.u32 [#allocation4], 4
          %s1164 = int_to_ptr.vmem [resolvable:$true] %s1163
          %1166 = dma.vmem_to_hbm [thread:$0]  %s1164, 32, %s3, [#allocation5]
        $region40: #{run.1} parent=27 // pred_fallthru
          _
        // Predicated region
        $region41: #{run.1} parent=27 // pred_check
          %p1167 = pneg %p127
        $region42: #{run.1} parent=27 // pred_check_branch
          %1169 = sbr.rel (%p1167) target = $region44
        $region43: #{run.1} parent=27 // pred_region
          %s1171 = ssub.s32 32, 32
          %1172 = vsyncadd [#allocation5], %s1171
          %s1174 = sshll.u32 [#allocation6], 4
          %s1175 = int_to_ptr.vmem [resolvable:$true] %s1174
          %1177 = dma.vmem_to_hbm [thread:$0]  %s1175, 32, %s4, [#allocation5]
        $region44: #{run.1} parent=27 // pred_fallthru
          _
        // Predicated region
        $region45: #{run.1} parent=27 // pred_check
          %p1178 = pneg %p106
        $region46: #{run.1} parent=27 // pred_check_branch
          %1180 = sbr.rel (%p1178) target = $region48
        $region47: #{run.1} parent=27 // pred_region
          %1181 = dma.done [#allocation5], 32
        $region48: #{run.1} parent=27 // pred_fallthru
          _
        // Predicated region
        $region49: #{run.1} parent=27 // pred_check
          %p1182 = pneg %p127
        $region50: #{run.1} parent=27 // pred_check_branch
          %1184 = sbr.rel (%p1182) target = $region52
        $region51: #{run.1} parent=27 // pred_region
          %1185 = dma.done [#allocation5], 32
        $region52: #{run.1} parent=27 // pred_fallthru
          _
      $region28: #{run.1} parent=5 // pred_fallthru
        _
      %p1186 = scmp.le.s32.totalorder 2, %s15
      // Predicated region
      $region53: #{run.1} parent=5 // pred_check
        %p1187 = pneg %p1186
      $region54: #{run.1} parent=5 // pred_check_branch
        %1189 = sbr.rel (%p1187) target = $region56
      $region55: #{run.1} parent=5 // pred_region
        %s1190 = ssub.s32 %s15, 2
        // Predicated region
        $region57: #{run.1} parent=55 // pred_check
          %p1191 = pneg %p91
        $region58: #{run.1} parent=55 // pred_check_branch
          %1193 = sbr.rel (%p1191) target = $region60
        $region59: #{run.1} parent=55 // pred_region
          %s1194 = sand.u32 %s76, 1
          %s1195 = scalar_lea.sflag [#allocation3], %s1194
          %s1196 = sand.u32 %s76, 1
          %s1197 = smul.addr %s1196, 16
          %s1198 = scalar_lea.vmem [#allocation2], %s1197
          %1199 = dma.done %s1195, 256
        $region60: #{run.1} parent=55 // pred_fallthru
          _
      $region56: #{run.1} parent=5 // pred_fallthru
        _
    $region6: #{run.1} parent=1 // loop_footer
      %s19 = sadd.s32 1, %s15
    $region7: #{run.1} parent=1 // loop_footer_branch
      %14 = sbr.rel target = $region3
    $region8: #{run.1} parent=1 // loop_exit
      _
    %1200 = vsyncpa [#allocation3], 1
    %s1201 = scalar_lea.sflag [#allocation3], 1
    %1202 = vsyncpa %s1201, 1
    %1203 = vsyncpa [#allocation5], 1

</llo_original>
